<compile_context>
chip_gen: v6e
topology: v6e:2x2x1
jax: 0.10.0
libtpu: 0.0.40
codegen_flags: <defaults>
</compile_context>

<pallas_src>
import jax
import jax.numpy as jnp
from jax import lax
from jax.experimental import pallas as pl
from jax.experimental.pallas import tpu as pltpu

TWO_48_MINUS_1 = float(2 ** 48 - 1)
INV_TWO_48_MINUS_1 = 1.0 / TWO_48_MINUS_1


# ----------------------------- kernel ---------------------------------------


def _make_encode_kernel(node_emb_dim, split_offset, e_block):
    """Kernel factory.

    split_offset: column where the 2nd conv's edge-linear starts inside the
      fused e_lin output (node_emb_dim on v5e, 128 on v6e/v7x so both slices
      are lane-tile aligned).
    e_block: static edge-block size tiling the one-hot gather/scatter
      aggregation (bounds mask VMEM to O(e_block * N)).
    """

    def encode_kernel(ids_ref, eattr_ref, src_ref, tgt_ref, batch_ref,
                      id_w1, id_b1, id_w2, id_b2,
                      e_w1, e_b1, e_w2, e_b2,
                      elw, elb,
                      c1_w1, c1_b1, c1_w2, c1_b2,
                      c2_w1, c2_b1, c2_w2, c2_b2,
                      out_ref):
        N = ids_ref.shape[1]
        E = eattr_ref.shape[1]
        B = out_ref.shape[1]
        bf16 = jnp.bfloat16

        ids = ids_ref[0]            # [N, 1] float32
        eattr = eattr_ref[0]        # [E, 1] float32
        src_col = src_ref[0]        # [E, 1] int32
        tgt_row = tgt_ref[0]        # [1, E] int32
        batch_row = batch_ref[0]    # [1, N] int32

        # node-id embedding.  First layer has K = 1 -> VPU broadcast (f32).
        norm = jnp.clip(ids * INV_TWO_48_MINUS_1, 0.0, 1.0)                    # [N, 1]
        h_id = jnp.maximum(norm * id_w1[...] + id_b1[...], 0.0)                # [N, node_emb]
        x = jnp.dot(h_id.astype(bf16), id_w2[...].astype(bf16),
                    preferred_element_type=jnp.float32) + id_b2[...]

        # edge embedding (same K = 1 trick).
        h_e = jnp.maximum(eattr * e_w1[...] + e_b1[...], 0.0)                  # [E, edge_emb]
        e = jnp.dot(h_e.astype(bf16), e_w2[...].astype(bf16),
                    preferred_element_type=jnp.float32) + e_b2[...]

        # Fused GINE edge-linear for BOTH conv layers: [E, split_offset+hidden].
        # Columns [0:node_emb] feed conv1, [split_offset:] feed conv2; on a
        # 256-wide MXU split_offset == 128 so both slices are lane aligned.
        e_lin = jnp.dot(e.astype(bf16), elw[0].astype(bf16),
                        preferred_element_type=jnp.float32) + elb[0]
        e_lin1 = e_lin[:, :node_emb_dim]
        e_lin2 = e_lin[:, split_offset:]

        n_eblk = E // e_block       # wrapper pads E to a multiple of e_block

        def gine(x_in, e_l, w1, b1, w2, b2):
            # GINEConv (eps = 0): nn(x_i + sum_j relu(x_j + lin(e_ij)))
            x_bf = x_in.astype(bf16)
            agg = jnp.zeros((N, x_in.shape[1]), jnp.float32)
            # Static unrolled loop over edge blocks: one-hot masks are built
            # per block ([e_block, N] + [N, e_block], bf16), so mask VMEM stays
            # bounded however large E gets.  Padded edges (src/tgt == -1) match
            # no iota entry and drop out of both matmuls.
            for blk in range(n_eblk):
                lo = blk * e_block
                src_b = src_col[lo:lo + e_block]          # [Eb, 1]
                tgt_b = tgt_row[:, lo:lo + e_block]       # [1, Eb]
                e_b = e_l[lo:lo + e_block]                # [Eb, C]
                gather = (src_b == lax.broadcasted_iota(
                    jnp.int32, (e_block, N), 1)).astype(bf16)
                scatter_t = (tgt_b == lax.broadcasted_iota(
                    jnp.int32, (N, e_block), 0)).astype(bf16)
                x_j = jnp.dot(gather, x_bf,
                              preferred_element_type=jnp.float32)              # [Eb, C]
                msg = jnp.maximum(x_j + e_b, 0.0)
                agg = agg + jnp.dot(scatter_t, msg.astype(bf16),
                                    preferred_element_type=jnp.float32)        # [N, C]
            h_in = (agg + x_in).astype(bf16)
            h = jnp.maximum(
                jnp.dot(h_in, w1.astype(bf16),
                        preferred_element_type=jnp.float32) + b1, 0.0)
            return jnp.dot(h.astype(bf16), w2.astype(bf16),
                           preferred_element_type=jnp.float32) + b2

        x = jnp.maximum(gine(x, e_lin1, c1_w1[0], c1_b1[0], c1_w2[0], c1_b2[0]), 0.0)
        x = jnp.maximum(gine(x, e_lin2, c2_w1[0], c2_b1[0], c2_w2[0], c2_b2[0]), 0.0)

        # global mean pool: bf16 one-hot matmul for sums, XLU lane reduce for
        # counts, EUP reciprocal instead of a VALU divide.  Padded nodes
        # (batch == -1) match no pool row.
        pool = (batch_row == lax.broadcasted_iota(
            jnp.int32, (B, N), 0)).astype(bf16)
        summed = jnp.dot(pool, x.astype(bf16),
                         preferred_element_type=jnp.float32)                   # [B, H]
        counts = jnp.sum(pool.astype(jnp.float32), axis=1, keepdims=True)      # [B, 1]
        inv = pl.reciprocal(jnp.maximum(counts, 1.0), approx=True)
        # TODO(synk): if num_graphs grows, write a lane-dense [1, B*H] output
        # block instead of a 64-wide last dim (avoids masked vst.msk stores).
        out_ref[0] = summed * inv

    return encode_kernel


# ----------------------------- wrappers --------------------------------------


def _is_narrow_mxu():
    """True on 128-wide-MXU chips (v2-v5); False on v6e/v7x (256-wide)."""
    try:
        kind = jax.devices()[0].device_kind.lower()
    except Exception:
        return False
    return any(t in kind for t in ("v2", "v3", "v4", "v5"))


def _vmem_limit_bytes():
    """Generation-aware VMEM limit: ~80% of physical, conservative fallback."""
    try:
        cap = int(pltpu.get_tpu_info().vmem_capacity_bytes)
        if cap > 0:
            return max(32 * 1024 * 1024, int(cap * 0.8))
    except Exception:
        pass
    return 48 * 1024 * 1024   # safe on every generation (v7x physical is 64 MiB)


def _pad_graph(graph, n_pad, e_pad):
    """Pad a graph to (n_pad nodes, e_pad edges). Pad indices use -1 sentinels."""
    ids, eattr, src, tgt, batch = graph
    n, e = ids.shape[0], eattr.shape[0]
    ids = jnp.pad(ids, ((0, n_pad - n), (0, 0)))
    eattr = jnp.pad(eattr, ((0, e_pad - e), (0, 0)))
    src = jnp.pad(src, (0, e_pad - e), constant_values=-1)
    tgt = jnp.pad(tgt, (0, e_pad - e), constant_values=-1)
    batch = jnp.pad(batch, (0, n_pad - n), constant_values=-1)
    return ids, eattr, src, tgt, batch


def _stack_conv_params(conv_sets, node_emb_dim, hidden_dim, split_offset):
    """Stack per-graph conv params on a leading G axis.

    The two GINE edge-linear layers are fused into one [edge_emb, width]
    weight with conv1 in columns [0:node_emb] and conv2 in columns
    [split_offset:split_offset+hidden] (zero padding in between on v6e/v7x so
    the in-kernel split is 128-lane aligned)."""
    width = split_offset + hidden_dim
    edge_dim = conv_sets[0][0][0].shape[0]

    def fuse(c1, c2):
        w = jnp.zeros((edge_dim, width), jnp.float32)
        w = w.at[:, :node_emb_dim].set(c1[0])
        w = w.at[:, split_offset:].set(c2[0])
        b = jnp.zeros((1, width), jnp.float32)
        b = b.at[:, :node_emb_dim].set(c1[1])
        b = b.at[:, split_offset:].set(c2[1])
        return w, b

    fused = [fuse(c1, c2) for c1, c2 in conv_sets]
    elw = jnp.stack([f[0] for f in fused])
    elb = jnp.stack([f[1] for f in fused])

    def stk(layer, idx):
        return jnp.stack([cs[layer][idx] for cs in conv_sets])

    c1 = tuple(stk(0, i) for i in (2, 3, 4, 5))
    c2 = tuple(stk(1, i) for i in (2, 3, 4, 5))
    return (elw, elb) + c1 + c2


def encode_graphs(graph_arrays, shared, stacked_convs, hidden_dim,
                  node_emb_dim, split_offset, e_block, num_graphs):
    ids, eattr, src, tgt, batch = graph_arrays
    G = ids.shape[0]

    def stacked_spec(arr):
        shp = arr.shape
        return pl.BlockSpec((1,) + shp[1:], lambda g: (g,) + (0,) * (len(shp) - 1))

    def shared_spec(arr):
        nd = arr.ndim
        return pl.BlockSpec(arr.shape, lambda g: (0,) * nd)

    graph_inputs = [ids, eattr, src, tgt, batch]
    shared_ws = list(shared["id_mlp"]) + list(shared["edge_mlp"])
    conv_ws = list(stacked_convs)

    inputs = graph_inputs + shared_ws + conv_ws
    in_specs = ([stacked_spec(a) for a in graph_inputs]
                + [shared_spec(a) for a in shared_ws]
                + [stacked_spec(a) for a in conv_ws])

    # TODO(synk): when G == 1 (use_goal=False) add a second "parallel" grid
    # axis (N- or B-blocked) so both v7x TensorCores stay busy.
    return pl.pallas_call(
        _make_encode_kernel(node_emb_dim, split_offset, e_block),
        out_shape=jax.ShapeDtypeStruct((G, num_graphs, hidden_dim), jnp.float32),
        grid=(G,),
        in_specs=in_specs,
        out_specs=pl.BlockSpec((1, num_graphs, hidden_dim), lambda g: (g, 0, 0)),
        compiler_params=pltpu.CompilerParams(
            dimension_semantics=("parallel",),          # 2-TC sharding on v7x
            vmem_limit_bytes=_vmem_limit_bytes()),
    )(*inputs)


def distance_estimator_forward(batch_dict, params, hidden_dim, node_emb_dim,
                               use_goal=True, e_block=512):
    depth = batch_dict["depth"].astype(jnp.float32).reshape(-1, 1)
    num_graphs = depth.shape[0]

    graphs = [batch_dict["state_graph"]]
    conv_sets = [params["state_convs"]]
    if use_goal and batch_dict.get("goal_graph") is not None:
        graphs.append(batch_dict["goal_graph"])
        conv_sets.append(params["goal_convs"])
    G = len(graphs)

    n_pad = max(g[0].shape[0] for g in graphs)
    e_raw = max(g[1].shape[0] for g in graphs)
    e_blk = min(e_block, e_raw)
    e_pad = ((e_raw + e_blk - 1) // e_blk) * e_blk      # multiple of the edge block
    padded = [_pad_graph(g, n_pad, e_pad) for g in graphs]

    ids = jnp.stack([p[0] for p in padded])                 # [G, N, 1] f32
    eattr = jnp.stack([p[1] for p in padded])               # [G, E, 1] f32
    src = jnp.stack([p[2][:, None] for p in padded])        # [G, E, 1] i32
    tgt = jnp.stack([p[3][None, :] for p in padded])        # [G, 1, E] i32
    batch = jnp.stack([p[4][None, :] for p in padded])      # [G, 1, N] i32

    # Lane-aligned fused edge-linear split on 256-wide MXUs; tight 96-wide
    # fusion on v5e (128-wide MXU) per perf review.
    split_offset = node_emb_dim if (_is_narrow_mxu() or node_emb_dim >= 128) else 128
    stacked_convs = _stack_conv_params(conv_sets, node_emb_dim, hidden_dim,
                                       split_offset)

    pooled = encode_graphs((ids, eattr, src, tgt, batch), params["shared"],
                           stacked_convs, hidden_dim, node_emb_dim,
                           split_offset, e_blk, num_graphs)

    rep = jnp.concatenate([pooled[i] for i in range(G)], axis=1)   # [B, G*H]
    z = jnp.concatenate([rep, depth], axis=1)                      # [B, G*H + 1]

    # Tiny [B, G*H+1] x [G*H+1, H] MLP: launching a kernel for it costs more
    # than the math, so it is left to XLA (per perf review).
    w1, b1, w2, b2 = params["regressor"]
    h = jnp.maximum(z @ w1 + b1, 0.0)
    return (h @ w2 + b2)[:, 0]


# -------------------------- parameter init -----------------------------------


def _dense(key, fan_in, fan_out):
    k1, k2 = jax.random.split(key)
    scale = 1.0 / (fan_in ** 0.5)
    w = jax.random.uniform(k1, (fan_in, fan_out), jnp.float32, -scale, scale)
    b = jax.random.uniform(k2, (1, fan_out), jnp.float32, -scale, scale)
    return w, b


def _mlp2_params(key, d_in, d_hidden, d_out):
    k1, k2 = jax.random.split(key)
    w1, b1 = _dense(k1, d_in, d_hidden)
    w2, b2 = _dense(k2, d_hidden, d_out)
    return (w1, b1, w2, b2)


def _gine_params(key, in_dim, hidden_dim, edge_dim):
    k1, k2 = jax.random.split(key)
    elw, elb = _dense(k1, edge_dim, in_dim)          # GINEConv edge lin
    w1, b1, w2, b2 = _mlp2_params(k2, in_dim, hidden_dim, hidden_dim)
    return (elw, elb, w1, b1, w2, b2)


def init_params(key, hidden_dim=64, node_emb_dim=32, edge_emb_dim=32, use_goal=True):
    keys = jax.random.split(key, 8)
    params = {
        "shared": {
            "id_mlp": _mlp2_params(keys[0], 1, node_emb_dim, node_emb_dim),
            "edge_mlp": _mlp2_params(keys[1], 1, edge_emb_dim, edge_emb_dim),
        },
        "state_convs": (
            _gine_params(keys[2], node_emb_dim, hidden_dim, edge_emb_dim),
            _gine_params(keys[3], hidden_dim, hidden_dim, edge_emb_dim),
        ),
        "regressor": _mlp2_params(
            keys[6], hidden_dim * (2 if use_goal else 1) + 1, hidden_dim, 1),
    }
    if use_goal:
        params["goal_convs"] = (
            _gine_params(keys[4], node_emb_dim, hidden_dim, edge_emb_dim),
            _gine_params(keys[5], hidden_dim, hidden_dim, edge_emb_dim),
        )
    return params


# ------------------------- pure-JAX reference ---------------------------------


def _mlp2(x, w1, b1, w2, b2):
    h = jnp.maximum(jnp.dot(x, w1, preferred_element_type=jnp.float32) + b1, 0.0)
    return jnp.dot(h, w2, preferred_element_type=jnp.float32) + b2


def _ref_encode(graph, shared, convs, num_graphs):
    ids, eattr, src, tgt, batch = graph
    norm = jnp.clip(ids / TWO_48_MINUS_1, 0.0, 1.0)
    x = _mlp2(norm, *shared["id_mlp"])
    e = _mlp2(eattr, *shared["edge_mlp"])

    def gine(x_in, p):
        elw, elb, w1, b1, w2, b2 = p
        msg = jnp.maximum(x_in[src] + (e @ elw + elb), 0.0)
        agg = jax.ops.segment_sum(msg, tgt, num_segments=x_in.shape[0])
        return _mlp2(agg + x_in, w1, b1, w2, b2)

    x = jnp.maximum(gine(x, convs[0]), 0.0)
    x = jnp.maximum(gine(x, convs[1]), 0.0)
    summed = jax.ops.segment_sum(x, batch, num_segments=num_graphs)
    counts = jax.ops.segment_sum(jnp.ones((x.shape[0], 1), jnp.float32), batch,
                                 num_segments=num_graphs)
    return summed / counts


def _ref_forward(batch_dict, params, use_goal=True):
    num_graphs = batch_dict["depth"].shape[0]
    s = _ref_encode(batch_dict["state_graph"], params["shared"],
                    params["state_convs"], num_graphs)
    if use_goal:
        g = _ref_encode(batch_dict["goal_graph"], params["shared"],
                        params["goal_convs"], num_graphs)
        rep = jnp.concatenate([s, g], axis=1)
    else:
        rep = s
    z = jnp.concatenate([rep, batch_dict["depth"].reshape(-1, 1)], axis=1)
    w1, b1, w2, b2 = params["regressor"]
    return _mlp2(z, w1, b1, w2, b2)[:, 0]


# ------------------------------- main -----------------------------------------


def _make_graph(key, num_graphs, nodes_per_graph, edges_per_graph):
    N = num_graphs * nodes_per_graph
    E = num_graphs * edges_per_graph
    k1, k2, k3, k4 = jax.random.split(key, 4)
    ids = jax.random.uniform(k1, (N, 1), jnp.float32, 0.0, TWO_48_MINUS_1)
    eattr = jax.random.uniform(k2, (E, 1), jnp.float32, 0.0, 1.0)
    # edges stay within their own graph
    local_src = jax.random.randint(k3, (num_graphs, edges_per_graph), 0, nodes_per_graph)
    local_tgt = jax.random.randint(k4, (num_graphs, edges_per_graph), 0, nodes_per_graph)
    offsets = (jnp.arange(num_graphs) * nodes_per_graph)[:, None]
    src = (local_src + offsets).reshape(E).astype(jnp.int32)
    tgt = (local_tgt + offsets).reshape(E).astype(jnp.int32)
    batch = jnp.repeat(jnp.arange(num_graphs, dtype=jnp.int32), nodes_per_graph)
    return (ids, eattr, src, tgt, batch)


if __name__ == "__main__":
    HIDDEN, NODE_EMB, EDGE_EMB = 64, 32, 32
    NUM_GRAPHS, NODES_PER_GRAPH, EDGES_PER_GRAPH = 2, 6, 10

    root = jax.random.PRNGKey(0)
    k_params, k_state, k_goal, k_depth = jax.random.split(root, 4)

    params = init_params(k_params, HIDDEN, NODE_EMB, EDGE_EMB, use_goal=True)

    batch_dict = {
        "state_graph": _make_graph(k_state, NUM_GRAPHS, NODES_PER_GRAPH, EDGES_PER_GRAPH),
        "goal_graph": _make_graph(k_goal, NUM_GRAPHS, NODES_PER_GRAPH, EDGES_PER_GRAPH),
        "depth": jax.random.randint(k_depth, (NUM_GRAPHS,), 1, 10).astype(jnp.float32),
    }

    # e_block=16 on the 20-edge demo exercises the multi-block edge tiling and
    # the -1-padded edge masking (production default is 512).
    logits = distance_estimator_forward(batch_dict, params, HIDDEN, NODE_EMB,
                                        use_goal=True, e_block=16)
    logits = jax.block_until_ready(logits)

    ref = _ref_forward(batch_dict, params, use_goal=True)
    assert logits.shape == (NUM_GRAPHS,)
    # bf16 MXU operands (f32 accumulation) + approx pool reciprocal give ~1e-2
    # level rounding vs the pure-f32 reference; structural bugs would be O(1),
    # so a 1e-1 tolerance still cleanly separates correct from broken.
    assert jnp.allclose(logits, ref, rtol=1e-1, atol=1e-1), (logits, ref)

    print("KERNEL_OK")
</pallas_src>

<mosaic_0001>
module attributes {stable_mosaic.version = 11 : i64} {
  func.func @encode_kernel(%arg0: i32, %arg1: memref<1x12x1xf32, #tpu.memory_space<vmem>>, %arg2: memref<1x32x1xf32, #tpu.memory_space<vmem>>, %arg3: memref<1x32x1xi32, #tpu.memory_space<vmem>>, %arg4: memref<1x1x32xi32, #tpu.memory_space<vmem>>, %arg5: memref<1x1x12xi32, #tpu.memory_space<vmem>>, %arg6: memref<1x32xf32, #tpu.memory_space<vmem>>, %arg7: memref<1x32xf32, #tpu.memory_space<vmem>>, %arg8: memref<32x32xf32, #tpu.memory_space<vmem>>, %arg9: memref<1x32xf32, #tpu.memory_space<vmem>>, %arg10: memref<1x32xf32, #tpu.memory_space<vmem>>, %arg11: memref<1x32xf32, #tpu.memory_space<vmem>>, %arg12: memref<32x32xf32, #tpu.memory_space<vmem>>, %arg13: memref<1x32xf32, #tpu.memory_space<vmem>>, %arg14: memref<1x32x192xf32, #tpu.memory_space<vmem>>, %arg15: memref<1x1x192xf32, #tpu.memory_space<vmem>>, %arg16: memref<1x32x64xf32, #tpu.memory_space<vmem>>, %arg17: memref<1x1x64xf32, #tpu.memory_space<vmem>>, %arg18: memref<1x64x64xf32, #tpu.memory_space<vmem>>, %arg19: memref<1x1x64xf32, #tpu.memory_space<vmem>>, %arg20: memref<1x64x64xf32, #tpu.memory_space<vmem>>, %arg21: memref<1x1x64xf32, #tpu.memory_space<vmem>>, %arg22: memref<1x64x64xf32, #tpu.memory_space<vmem>>, %arg23: memref<1x1x64xf32, #tpu.memory_space<vmem>>, %arg24: memref<1x2x64xf32, #tpu.memory_space<vmem>>) attributes {dimension_semantics = [#tpu.dimension_semantics<parallel>], iteration_bounds = array<i64: 2>, scalar_prefetch = 0 : i64, scratch_operands = 0 : i64, tpu.core_type = #tpu.core_type<tc>, window_params = [{transform_indices = @transform_0, window_bounds = array<i64: 1, 12, 1>}, {transform_indices = @transform_1, window_bounds = array<i64: 1, 32, 1>}, {transform_indices = @transform_2, window_bounds = array<i64: 1, 32, 1>}, {transform_indices = @transform_3, window_bounds = array<i64: 1, 1, 32>}, {transform_indices = @transform_4, window_bounds = array<i64: 1, 1, 12>}, {pipeline_mode = #tpu.pipeline_mode<synchronous>, transform_indices = @transform_5, window_bounds = array<i64: 1, 32>}, {pipeline_mode = #tpu.pipeline_mode<synchronous>, transform_indices = @transform_6, window_bounds = array<i64: 1, 32>}, {pipeline_mode = #tpu.pipeline_mode<synchronous>, transform_indices = @transform_7, window_bounds = array<i64: 32, 32>}, {pipeline_mode = #tpu.pipeline_mode<synchronous>, transform_indices = @transform_8, window_bounds = array<i64: 1, 32>}, {pipeline_mode = #tpu.pipeline_mode<synchronous>, transform_indices = @transform_9, window_bounds = array<i64: 1, 32>}, {pipeline_mode = #tpu.pipeline_mode<synchronous>, transform_indices = @transform_10, window_bounds = array<i64: 1, 32>}, {pipeline_mode = #tpu.pipeline_mode<synchronous>, transform_indices = @transform_11, window_bounds = array<i64: 32, 32>}, {pipeline_mode = #tpu.pipeline_mode<synchronous>, transform_indices = @transform_12, window_bounds = array<i64: 1, 32>}, {transform_indices = @transform_13, window_bounds = array<i64: 1, 32, 192>}, {transform_indices = @transform_14, window_bounds = array<i64: 1, 1, 192>}, {transform_indices = @transform_15, window_bounds = array<i64: 1, 32, 64>}, {transform_indices = @transform_16, window_bounds = array<i64: 1, 1, 64>}, {transform_indices = @transform_17, window_bounds = array<i64: 1, 64, 64>}, {transform_indices = @transform_18, window_bounds = array<i64: 1, 1, 64>}, {transform_indices = @transform_19, window_bounds = array<i64: 1, 64, 64>}, {transform_indices = @transform_20, window_bounds = array<i64: 1, 1, 64>}, {transform_indices = @transform_21, window_bounds = array<i64: 1, 64, 64>}, {transform_indices = @transform_22, window_bounds = array<i64: 1, 1, 64>}, {transform_indices = @transform_23, window_bounds = array<i64: 1, 2, 64>}]} {
    %c0 = arith.constant 0 : index
    %c0_0 = arith.constant 0 : index
    %c0_1 = arith.constant 0 : index
    %0 = vector.load %arg1[%c0, %c0_0, %c0_1] : memref<1x12x1xf32, #tpu.memory_space<vmem>>, vector<1x12x1xf32>
    %1 = vector.shape_cast %0 : vector<1x12x1xf32> to vector<12x1xf32>
    %c0_2 = arith.constant 0 : index
    %c0_3 = arith.constant 0 : index
    %c0_4 = arith.constant 0 : index
    %2 = vector.load %arg2[%c0_2, %c0_3, %c0_4] : memref<1x32x1xf32, #tpu.memory_space<vmem>>, vector<1x32x1xf32>
    %3 = vector.shape_cast %2 : vector<1x32x1xf32> to vector<32x1xf32>
    %c0_5 = arith.constant 0 : index
    %c0_6 = arith.constant 0 : index
    %c0_7 = arith.constant 0 : index
    %4 = vector.load %arg3[%c0_5, %c0_6, %c0_7] : memref<1x32x1xi32, #tpu.memory_space<vmem>>, vector<1x32x1xi32>
    %5 = vector.shape_cast %4 : vector<1x32x1xi32> to vector<32x1xi32>
    %c0_8 = arith.constant 0 : index
    %c0_9 = arith.constant 0 : index
    %c0_10 = arith.constant 0 : index
    %6 = vector.load %arg4[%c0_8, %c0_9, %c0_10] : memref<1x1x32xi32, #tpu.memory_space<vmem>>, vector<1x1x32xi32>
    %7 = vector.shape_cast %6 : vector<1x1x32xi32> to vector<1x32xi32>
    %c0_11 = arith.constant 0 : index
    %c0_12 = arith.constant 0 : index
    %c0_13 = arith.constant 0 : index
    %8 = vector.load %arg5[%c0_11, %c0_12, %c0_13] : memref<1x1x12xi32, #tpu.memory_space<vmem>>, vector<1x1x12xi32>
    %9 = vector.shape_cast %8 : vector<1x1x12xi32> to vector<1x12xi32>
    %cst = arith.constant 3.55271368E-15 : f32
    %10 = vector.broadcast %cst : f32 to vector<12x1xf32>
    %11 = arith.mulf %1, %10 : vector<12x1xf32>
    %cst_14 = arith.constant 0.000000e+00 : f32
    %cst_15 = arith.constant 1.000000e+00 : f32
    %12 = vector.broadcast %cst_14 : f32 to vector<12x1xf32>
    %13 = arith.maximumf %12, %11 : vector<12x1xf32>
    %14 = vector.broadcast %cst_15 : f32 to vector<12x1xf32>
    %15 = arith.minimumf %14, %13 : vector<12x1xf32>
    %c0_16 = arith.constant 0 : index
    %c0_17 = arith.constant 0 : index
    %16 = vector.load %arg6[%c0_16, %c0_17] : memref<1x32xf32, #tpu.memory_space<vmem>>, vector<1x32xf32>
    %17 = vector.broadcast %15 : vector<12x1xf32> to vector<12x32xf32>
    %18 = vector.broadcast %16 : vector<1x32xf32> to vector<12x32xf32>
    %19 = arith.mulf %17, %18 : vector<12x32xf32>
    %c0_18 = arith.constant 0 : index
    %c0_19 = arith.constant 0 : index
    %20 = vector.load %arg7[%c0_18, %c0_19] : memref<1x32xf32, #tpu.memory_space<vmem>>, vector<1x32xf32>
    %21 = vector.broadcast %20 : vector<1x32xf32> to vector<12x32xf32>
    %22 = arith.addf %19, %21 : vector<12x32xf32>
    %cst_20 = arith.constant 0.000000e+00 : f32
    %23 = vector.broadcast %cst_20 : f32 to vector<12x32xf32>
    %24 = arith.maximumf %22, %23 : vector<12x32xf32>
    %25 = arith.truncf %24 : vector<12x32xf32> to vector<12x32xbf16>
    %c0_21 = arith.constant 0 : index
    %c0_22 = arith.constant 0 : index
    %26 = vector.load %arg8[%c0_21, %c0_22] : memref<32x32xf32, #tpu.memory_space<vmem>>, vector<32x32xf32>
    %27 = arith.truncf %26 : vector<32x32xf32> to vector<32x32xbf16>
    %cst_23 = arith.constant dense<0.000000e+00> : vector<12x32xf32>
    %28 = tpu.matmul %25, %27, %cst_23 {dimension_numbers = #tpu.dot_dimension_numbers<[1], [0], [0], [1], [0, 0, 1, 1], [], []>} : vector<12x32xbf16>, vector<32x32xbf16>, vector<12x32xf32> -> vector<12x32xf32>
    %c0_24 = arith.constant 0 : index
    %c0_25 = arith.constant 0 : index
    %29 = vector.load %arg9[%c0_24, %c0_25] : memref<1x32xf32, #tpu.memory_space<vmem>>, vector<1x32xf32>
    %30 = vector.broadcast %29 : vector<1x32xf32> to vector<12x32xf32>
    %31 = arith.addf %28, %30 : vector<12x32xf32>
    %c0_26 = arith.constant 0 : index
    %c0_27 = arith.constant 0 : index
    %32 = vector.load %arg10[%c0_26, %c0_27] : memref<1x32xf32, #tpu.memory_space<vmem>>, vector<1x32xf32>
    %33 = vector.broadcast %3 : vector<32x1xf32> to vector<32x32xf32>
    %34 = vector.broadcast %32 : vector<1x32xf32> to vector<32x32xf32>
    %35 = arith.mulf %33, %34 : vector<32x32xf32>
    %c0_28 = arith.constant 0 : index
    %c0_29 = arith.constant 0 : index
    %36 = vector.load %arg11[%c0_28, %c0_29] : memref<1x32xf32, #tpu.memory_space<vmem>>, vector<1x32xf32>
    %37 = vector.broadcast %36 : vector<1x32xf32> to vector<32x32xf32>
    %38 = arith.addf %35, %37 : vector<32x32xf32>
    %cst_30 = arith.constant 0.000000e+00 : f32
    %39 = vector.broadcast %cst_30 : f32 to vector<32x32xf32>
    %40 = arith.maximumf %38, %39 : vector<32x32xf32>
    %41 = arith.truncf %40 : vector<32x32xf32> to vector<32x32xbf16>
    %c0_31 = arith.constant 0 : index
    %c0_32 = arith.constant 0 : index
    %42 = vector.load %arg12[%c0_31, %c0_32] : memref<32x32xf32, #tpu.memory_space<vmem>>, vector<32x32xf32>
    %43 = arith.truncf %42 : vector<32x32xf32> to vector<32x32xbf16>
    %cst_33 = arith.constant dense<0.000000e+00> : vector<32x32xf32>
    %44 = tpu.matmul %41, %43, %cst_33 {dimension_numbers = #tpu.dot_dimension_numbers<[1], [0], [0], [1], [0, 0, 1, 1], [], []>} : vector<32x32xbf16>, vector<32x32xbf16>, vector<32x32xf32> -> vector<32x32xf32>
    %c0_34 = arith.constant 0 : index
    %c0_35 = arith.constant 0 : index
    %45 = vector.load %arg13[%c0_34, %c0_35] : memref<1x32xf32, #tpu.memory_space<vmem>>, vector<1x32xf32>
    %46 = vector.broadcast %45 : vector<1x32xf32> to vector<32x32xf32>
    %47 = arith.addf %44, %46 : vector<32x32xf32>
    %48 = arith.truncf %47 : vector<32x32xf32> to vector<32x32xbf16>
    %c0_36 = arith.constant 0 : index
    %c0_37 = arith.constant 0 : index
    %c0_38 = arith.constant 0 : index
    %49 = vector.load %arg14[%c0_36, %c0_37, %c0_38] : memref<1x32x192xf32, #tpu.memory_space<vmem>>, vector<1x32x192xf32>
    %50 = vector.shape_cast %49 : vector<1x32x192xf32> to vector<32x192xf32>
    %51 = arith.truncf %50 : vector<32x192xf32> to vector<32x192xbf16>
    %cst_39 = arith.constant dense<0.000000e+00> : vector<32x192xf32>
    %52 = tpu.matmul %48, %51, %cst_39 {dimension_numbers = #tpu.dot_dimension_numbers<[1], [0], [0], [1], [0, 0, 1, 1], [], []>} : vector<32x32xbf16>, vector<32x192xbf16>, vector<32x192xf32> -> vector<32x192xf32>
    %c0_40 = arith.constant 0 : index
    %c0_41 = arith.constant 0 : index
    %c0_42 = arith.constant 0 : index
    %53 = vector.load %arg15[%c0_40, %c0_41, %c0_42] : memref<1x1x192xf32, #tpu.memory_space<vmem>>, vector<1x1x192xf32>
    %54 = vector.shape_cast %53 : vector<1x1x192xf32> to vector<1x192xf32>
    %55 = vector.broadcast %54 : vector<1x192xf32> to vector<32x192xf32>
    %56 = arith.addf %52, %55 : vector<32x192xf32>
    %57 = vector.extract_strided_slice %56 {offsets = [0, 0], sizes = [32, 32], strides = [1, 1]} : vector<32x192xf32> to vector<32x32xf32>
    %58 = vector.extract_strided_slice %56 {offsets = [0, 128], sizes = [32, 64], strides = [1, 1]} : vector<32x192xf32> to vector<32x64xf32>
    %c0_43 = arith.constant 0 : index
    %c0_44 = arith.constant 0 : index
    %c0_45 = arith.constant 0 : index
    %59 = vector.load %arg16[%c0_43, %c0_44, %c0_45] : memref<1x32x64xf32, #tpu.memory_space<vmem>>, vector<1x32x64xf32>
    %60 = vector.shape_cast %59 : vector<1x32x64xf32> to vector<32x64xf32>
    %c0_46 = arith.constant 0 : index
    %c0_47 = arith.constant 0 : index
    %c0_48 = arith.constant 0 : index
    %61 = vector.load %arg17[%c0_46, %c0_47, %c0_48] : memref<1x1x64xf32, #tpu.memory_space<vmem>>, vector<1x1x64xf32>
    %62 = vector.shape_cast %61 : vector<1x1x64xf32> to vector<1x64xf32>
    %c0_49 = arith.constant 0 : index
    %c0_50 = arith.constant 0 : index
    %c0_51 = arith.constant 0 : index
    %63 = vector.load %arg18[%c0_49, %c0_50, %c0_51] : memref<1x64x64xf32, #tpu.memory_space<vmem>>, vector<1x64x64xf32>
    %64 = vector.shape_cast %63 : vector<1x64x64xf32> to vector<64x64xf32>
    %c0_52 = arith.constant 0 : index
    %c0_53 = arith.constant 0 : index
    %c0_54 = arith.constant 0 : index
    %65 = vector.load %arg19[%c0_52, %c0_53, %c0_54] : memref<1x1x64xf32, #tpu.memory_space<vmem>>, vector<1x1x64xf32>
    %66 = vector.shape_cast %65 : vector<1x1x64xf32> to vector<1x64xf32>
    %67 = arith.truncf %31 : vector<12x32xf32> to vector<12x32xbf16>
    %cst_55 = arith.constant 0.000000e+00 : f32
    %68 = vector.broadcast %cst_55 : f32 to vector<12x32xf32>
    %69 = vector.extract_strided_slice %5 {offsets = [0, 0], sizes = [16, 1], strides = [1, 1]} : vector<32x1xi32> to vector<16x1xi32>
    %70 = vector.extract_strided_slice %7 {offsets = [0, 0], sizes = [1, 16], strides = [1, 1]} : vector<1x32xi32> to vector<1x16xi32>
    %71 = vector.extract_strided_slice %57 {offsets = [0, 0], sizes = [16, 32], strides = [1, 1]} : vector<32x32xf32> to vector<16x32xf32>
    %72 = tpu.iota {dimensions = array<i32: 1>} : vector<16x12xi32>
    %73 = vector.broadcast %69 : vector<16x1xi32> to vector<16x12xi32>
    %74 = arith.cmpi eq, %73, %72 : vector<16x12xi32>
    %75 = arith.extui %74 : vector<16x12xi1> to vector<16x12xi32>
    %76 = arith.sitofp %75 : vector<16x12xi32> to vector<16x12xf32>
    %77 = arith.truncf %76 : vector<16x12xf32> to vector<16x12xbf16>
    %78 = tpu.iota {dimensions = array<i32: 0>} : vector<12x16xi32>
    %79 = vector.broadcast %70 : vector<1x16xi32> to vector<12x16xi32>
    %80 = arith.cmpi eq, %79, %78 : vector<12x16xi32>
    %81 = arith.extui %80 : vector<12x16xi1> to vector<12x16xi32>
    %82 = arith.sitofp %81 : vector<12x16xi32> to vector<12x16xf32>
    %83 = arith.truncf %82 : vector<12x16xf32> to vector<12x16xbf16>
    %cst_56 = arith.constant dense<0.000000e+00> : vector<16x32xf32>
    %84 = tpu.matmul %77, %67, %cst_56 {dimension_numbers = #tpu.dot_dimension_numbers<[1], [0], [0], [1], [0, 0, 1, 1], [], []>} : vector<16x12xbf16>, vector<12x32xbf16>, vector<16x32xf32> -> vector<16x32xf32>
    %85 = arith.addf %84, %71 : vector<16x32xf32>
    %cst_57 = arith.constant 0.000000e+00 : f32
    %86 = vector.broadcast %cst_57 : f32 to vector<16x32xf32>
    %87 = arith.maximumf %85, %86 : vector<16x32xf32>
    %88 = arith.truncf %87 : vector<16x32xf32> to vector<16x32xbf16>
    %cst_58 = arith.constant dense<0.000000e+00> : vector<12x32xf32>
    %89 = tpu.matmul %83, %88, %cst_58 {dimension_numbers = #tpu.dot_dimension_numbers<[1], [0], [0], [1], [0, 0, 1, 1], [], []>} : vector<12x16xbf16>, vector<16x32xbf16>, vector<12x32xf32> -> vector<12x32xf32>
    %90 = arith.addf %68, %89 : vector<12x32xf32>
    %91 = vector.extract_strided_slice %5 {offsets = [16, 0], sizes = [16, 1], strides = [1, 1]} : vector<32x1xi32> to vector<16x1xi32>
    %92 = vector.extract_strided_slice %7 {offsets = [0, 16], sizes = [1, 16], strides = [1, 1]} : vector<1x32xi32> to vector<1x16xi32>
    %93 = vector.extract_strided_slice %57 {offsets = [16, 0], sizes = [16, 32], strides = [1, 1]} : vector<32x32xf32> to vector<16x32xf32>
    %94 = tpu.iota {dimensions = array<i32: 1>} : vector<16x12xi32>
    %95 = vector.broadcast %91 : vector<16x1xi32> to vector<16x12xi32>
    %96 = arith.cmpi eq, %95, %94 : vector<16x12xi32>
    %97 = arith.extui %96 : vector<16x12xi1> to vector<16x12xi32>
    %98 = arith.sitofp %97 : vector<16x12xi32> to vector<16x12xf32>
    %99 = arith.truncf %98 : vector<16x12xf32> to vector<16x12xbf16>
    %100 = tpu.iota {dimensions = array<i32: 0>} : vector<12x16xi32>
    %101 = vector.broadcast %92 : vector<1x16xi32> to vector<12x16xi32>
    %102 = arith.cmpi eq, %101, %100 : vector<12x16xi32>
    %103 = arith.extui %102 : vector<12x16xi1> to vector<12x16xi32>
    %104 = arith.sitofp %103 : vector<12x16xi32> to vector<12x16xf32>
    %105 = arith.truncf %104 : vector<12x16xf32> to vector<12x16xbf16>
    %cst_59 = arith.constant dense<0.000000e+00> : vector<16x32xf32>
    %106 = tpu.matmul %99, %67, %cst_59 {dimension_numbers = #tpu.dot_dimension_numbers<[1], [0], [0], [1], [0, 0, 1, 1], [], []>} : vector<16x12xbf16>, vector<12x32xbf16>, vector<16x32xf32> -> vector<16x32xf32>
    %107 = arith.addf %106, %93 : vector<16x32xf32>
    %cst_60 = arith.constant 0.000000e+00 : f32
    %108 = vector.broadcast %cst_60 : f32 to vector<16x32xf32>
    %109 = arith.maximumf %107, %108 : vector<16x32xf32>
    %110 = arith.truncf %109 : vector<16x32xf32> to vector<16x32xbf16>
    %cst_61 = arith.constant dense<0.000000e+00> : vector<12x32xf32>
    %111 = tpu.matmul %105, %110, %cst_61 {dimension_numbers = #tpu.dot_dimension_numbers<[1], [0], [0], [1], [0, 0, 1, 1], [], []>} : vector<12x16xbf16>, vector<16x32xbf16>, vector<12x32xf32> -> vector<12x32xf32>
    %112 = arith.addf %90, %111 : vector<12x32xf32>
    %113 = arith.addf %112, %31 : vector<12x32xf32>
    %114 = arith.truncf %113 : vector<12x32xf32> to vector<12x32xbf16>
    %115 = arith.truncf %60 : vector<32x64xf32> to vector<32x64xbf16>
    %cst_62 = arith.constant dense<0.000000e+00> : vector<12x64xf32>
    %116 = tpu.matmul %114, %115, %cst_62 {dimension_numbers = #tpu.dot_dimension_numbers<[1], [0], [0], [1], [0, 0, 1, 1], [], []>} : vector<12x32xbf16>, vector<32x64xbf16>, vector<12x64xf32> -> vector<12x64xf32>
    %117 = vector.broadcast %62 : vector<1x64xf32> to vector<12x64xf32>
    %118 = arith.addf %116, %117 : vector<12x64xf32>
    %cst_63 = arith.constant 0.000000e+00 : f32
    %119 = vector.broadcast %cst_63 : f32 to vector<12x64xf32>
    %120 = arith.maximumf %118, %119 : vector<12x64xf32>
    %121 = arith.truncf %120 : vector<12x64xf32> to vector<12x64xbf16>
    %122 = arith.truncf %64 : vector<64x64xf32> to vector<64x64xbf16>
    %cst_64 = arith.constant dense<0.000000e+00> : vector<12x64xf32>
    %123 = tpu.matmul %121, %122, %cst_64 {dimension_numbers = #tpu.dot_dimension_numbers<[1], [0], [0], [1], [0, 0, 1, 1], [], []>} : vector<12x64xbf16>, vector<64x64xbf16>, vector<12x64xf32> -> vector<12x64xf32>
    %124 = vector.broadcast %66 : vector<1x64xf32> to vector<12x64xf32>
    %125 = arith.addf %123, %124 : vector<12x64xf32>
    %cst_65 = arith.constant 0.000000e+00 : f32
    %126 = vector.broadcast %cst_65 : f32 to vector<12x64xf32>
    %127 = arith.maximumf %125, %126 : vector<12x64xf32>
    %c0_66 = arith.constant 0 : index
    %c0_67 = arith.constant 0 : index
    %c0_68 = arith.constant 0 : index
    %128 = vector.load %arg20[%c0_66, %c0_67, %c0_68] : memref<1x64x64xf32, #tpu.memory_space<vmem>>, vector<1x64x64xf32>
    %129 = vector.shape_cast %128 : vector<1x64x64xf32> to vector<64x64xf32>
    %c0_69 = arith.constant 0 : index
    %c0_70 = arith.constant 0 : index
    %c0_71 = arith.constant 0 : index
    %130 = vector.load %arg21[%c0_69, %c0_70, %c0_71] : memref<1x1x64xf32, #tpu.memory_space<vmem>>, vector<1x1x64xf32>
    %131 = vector.shape_cast %130 : vector<1x1x64xf32> to vector<1x64xf32>
    %c0_72 = arith.constant 0 : index
    %c0_73 = arith.constant 0 : index
    %c0_74 = arith.constant 0 : index
    %132 = vector.load %arg22[%c0_72, %c0_73, %c0_74] : memref<1x64x64xf32, #tpu.memory_space<vmem>>, vector<1x64x64xf32>
    %133 = vector.shape_cast %132 : vector<1x64x64xf32> to vector<64x64xf32>
    %c0_75 = arith.constant 0 : index
    %c0_76 = arith.constant 0 : index
    %c0_77 = arith.constant 0 : index
    %134 = vector.load %arg23[%c0_75, %c0_76, %c0_77] : memref<1x1x64xf32, #tpu.memory_space<vmem>>, vector<1x1x64xf32>
    %135 = vector.shape_cast %134 : vector<1x1x64xf32> to vector<1x64xf32>
    %136 = arith.truncf %127 : vector<12x64xf32> to vector<12x64xbf16>
    %cst_78 = arith.constant 0.000000e+00 : f32
    %137 = vector.broadcast %cst_78 : f32 to vector<12x64xf32>
    %138 = vector.extract_strided_slice %5 {offsets = [0, 0], sizes = [16, 1], strides = [1, 1]} : vector<32x1xi32> to vector<16x1xi32>
    %139 = vector.extract_strided_slice %7 {offsets = [0, 0], sizes = [1, 16], strides = [1, 1]} : vector<1x32xi32> to vector<1x16xi32>
    %140 = vector.extract_strided_slice %58 {offsets = [0, 0], sizes = [16, 64], strides = [1, 1]} : vector<32x64xf32> to vector<16x64xf32>
    %141 = tpu.iota {dimensions = array<i32: 1>} : vector<16x12xi32>
    %142 = vector.broadcast %138 : vector<16x1xi32> to vector<16x12xi32>
    %143 = arith.cmpi eq, %142, %141 : vector<16x12xi32>
    %144 = arith.extui %143 : vector<16x12xi1> to vector<16x12xi32>
    %145 = arith.sitofp %144 : vector<16x12xi32> to vector<16x12xf32>
    %146 = arith.truncf %145 : vector<16x12xf32> to vector<16x12xbf16>
    %147 = tpu.iota {dimensions = array<i32: 0>} : vector<12x16xi32>
    %148 = vector.broadcast %139 : vector<1x16xi32> to vector<12x16xi32>
    %149 = arith.cmpi eq, %148, %147 : vector<12x16xi32>
    %150 = arith.extui %149 : vector<12x16xi1> to vector<12x16xi32>
    %151 = arith.sitofp %150 : vector<12x16xi32> to vector<12x16xf32>
    %152 = arith.truncf %151 : vector<12x16xf32> to vector<12x16xbf16>
    %cst_79 = arith.constant dense<0.000000e+00> : vector<16x64xf32>
    %153 = tpu.matmul %146, %136, %cst_79 {dimension_numbers = #tpu.dot_dimension_numbers<[1], [0], [0], [1], [0, 0, 1, 1], [], []>} : vector<16x12xbf16>, vector<12x64xbf16>, vector<16x64xf32> -> vector<16x64xf32>
    %154 = arith.addf %153, %140 : vector<16x64xf32>
    %cst_80 = arith.constant 0.000000e+00 : f32
    %155 = vector.broadcast %cst_80 : f32 to vector<16x64xf32>
    %156 = arith.maximumf %154, %155 : vector<16x64xf32>
    %157 = arith.truncf %156 : vector<16x64xf32> to vector<16x64xbf16>
    %cst_81 = arith.constant dense<0.000000e+00> : vector<12x64xf32>
    %158 = tpu.matmul %152, %157, %cst_81 {dimension_numbers = #tpu.dot_dimension_numbers<[1], [0], [0], [1], [0, 0, 1, 1], [], []>} : vector<12x16xbf16>, vector<16x64xbf16>, vector<12x64xf32> -> vector<12x64xf32>
    %159 = arith.addf %137, %158 : vector<12x64xf32>
    %160 = vector.extract_strided_slice %5 {offsets = [16, 0], sizes = [16, 1], strides = [1, 1]} : vector<32x1xi32> to vector<16x1xi32>
    %161 = vector.extract_strided_slice %7 {offsets = [0, 16], sizes = [1, 16], strides = [1, 1]} : vector<1x32xi32> to vector<1x16xi32>
    %162 = vector.extract_strided_slice %58 {offsets = [16, 0], sizes = [16, 64], strides = [1, 1]} : vector<32x64xf32> to vector<16x64xf32>
    %163 = tpu.iota {dimensions = array<i32: 1>} : vector<16x12xi32>
    %164 = vector.broadcast %160 : vector<16x1xi32> to vector<16x12xi32>
    %165 = arith.cmpi eq, %164, %163 : vector<16x12xi32>
    %166 = arith.extui %165 : vector<16x12xi1> to vector<16x12xi32>
    %167 = arith.sitofp %166 : vector<16x12xi32> to vector<16x12xf32>
    %168 = arith.truncf %167 : vector<16x12xf32> to vector<16x12xbf16>
    %169 = tpu.iota {dimensions = array<i32: 0>} : vector<12x16xi32>
    %170 = vector.broadcast %161 : vector<1x16xi32> to vector<12x16xi32>
    %171 = arith.cmpi eq, %170, %169 : vector<12x16xi32>
    %172 = arith.extui %171 : vector<12x16xi1> to vector<12x16xi32>
    %173 = arith.sitofp %172 : vector<12x16xi32> to vector<12x16xf32>
    %174 = arith.truncf %173 : vector<12x16xf32> to vector<12x16xbf16>
    %cst_82 = arith.constant dense<0.000000e+00> : vector<16x64xf32>
    %175 = tpu.matmul %168, %136, %cst_82 {dimension_numbers = #tpu.dot_dimension_numbers<[1], [0], [0], [1], [0, 0, 1, 1], [], []>} : vector<16x12xbf16>, vector<12x64xbf16>, vector<16x64xf32> -> vector<16x64xf32>
    %176 = arith.addf %175, %162 : vector<16x64xf32>
    %cst_83 = arith.constant 0.000000e+00 : f32
    %177 = vector.broadcast %cst_83 : f32 to vector<16x64xf32>
    %178 = arith.maximumf %176, %177 : vector<16x64xf32>
    %179 = arith.truncf %178 : vector<16x64xf32> to vector<16x64xbf16>
    %cst_84 = arith.constant dense<0.000000e+00> : vector<12x64xf32>
    %180 = tpu.matmul %174, %179, %cst_84 {dimension_numbers = #tpu.dot_dimension_numbers<[1], [0], [0], [1], [0, 0, 1, 1], [], []>} : vector<12x16xbf16>, vector<16x64xbf16>, vector<12x64xf32> -> vector<12x64xf32>
    %181 = arith.addf %159, %180 : vector<12x64xf32>
    %182 = arith.addf %181, %127 : vector<12x64xf32>
    %183 = arith.truncf %182 : vector<12x64xf32> to vector<12x64xbf16>
    %184 = arith.truncf %129 : vector<64x64xf32> to vector<64x64xbf16>
    %cst_85 = arith.constant dense<0.000000e+00> : vector<12x64xf32>
    %185 = tpu.matmul %183, %184, %cst_85 {dimension_numbers = #tpu.dot_dimension_numbers<[1], [0], [0], [1], [0, 0, 1, 1], [], []>} : vector<12x64xbf16>, vector<64x64xbf16>, vector<12x64xf32> -> vector<12x64xf32>
    %186 = vector.broadcast %131 : vector<1x64xf32> to vector<12x64xf32>
    %187 = arith.addf %185, %186 : vector<12x64xf32>
    %cst_86 = arith.constant 0.000000e+00 : f32
    %188 = vector.broadcast %cst_86 : f32 to vector<12x64xf32>
    %189 = arith.maximumf %187, %188 : vector<12x64xf32>
    %190 = arith.truncf %189 : vector<12x64xf32> to vector<12x64xbf16>
    %191 = arith.truncf %133 : vector<64x64xf32> to vector<64x64xbf16>
    %cst_87 = arith.constant dense<0.000000e+00> : vector<12x64xf32>
    %192 = tpu.matmul %190, %191, %cst_87 {dimension_numbers = #tpu.dot_dimension_numbers<[1], [0], [0], [1], [0, 0, 1, 1], [], []>} : vector<12x64xbf16>, vector<64x64xbf16>, vector<12x64xf32> -> vector<12x64xf32>
    %193 = vector.broadcast %135 : vector<1x64xf32> to vector<12x64xf32>
    %194 = arith.addf %192, %193 : vector<12x64xf32>
    %cst_88 = arith.constant 0.000000e+00 : f32
    %195 = vector.broadcast %cst_88 : f32 to vector<12x64xf32>
    %196 = arith.maximumf %194, %195 : vector<12x64xf32>
    %197 = tpu.iota {dimensions = array<i32: 0>} : vector<2x12xi32>
    %198 = vector.broadcast %9 : vector<1x12xi32> to vector<2x12xi32>
    %199 = arith.cmpi eq, %198, %197 : vector<2x12xi32>
    %200 = arith.extui %199 : vector<2x12xi1> to vector<2x12xi32>
    %201 = arith.sitofp %200 : vector<2x12xi32> to vector<2x12xf32>
    %202 = arith.truncf %201 : vector<2x12xf32> to vector<2x12xbf16>
    %203 = arith.truncf %196 : vector<12x64xf32> to vector<12x64xbf16>
    %cst_89 = arith.constant dense<0.000000e+00> : vector<2x64xf32>
    %204 = tpu.matmul %202, %203, %cst_89 {dimension_numbers = #tpu.dot_dimension_numbers<[1], [0], [0], [1], [0, 0, 1, 1], [], []>} : vector<2x12xbf16>, vector<12x64xbf16>, vector<2x64xf32> -> vector<2x64xf32>
    %205 = arith.extf %202 : vector<2x12xbf16> to vector<2x12xf32>
    %cst_90 = arith.constant dense<0.000000e+00> : vector<2xf32>
    %206 = vector.multi_reduction <add>, %205, %cst_90 [1] : vector<2x12xf32> to vector<2xf32>
    %207 = vector.shape_cast %206 : vector<2xf32> to vector<2x1xf32>
    %cst_91 = arith.constant 1.000000e+00 : f32
    %208 = vector.broadcast %cst_91 : f32 to vector<2x1xf32>
    %209 = arith.maximumf %207, %208 : vector<2x1xf32>
    %210 = tpu.reciprocal %209 {approx = true} : vector<2x1xf32> -> vector<2x1xf32>
    %211 = vector.broadcast %210 : vector<2x1xf32> to vector<2x64xf32>
    %212 = arith.mulf %204, %211 : vector<2x64xf32>
    %c0_92 = arith.constant 0 : index
    %c0_93 = arith.constant 0 : index
    %c0_94 = arith.constant 0 : index
    %213 = vector.load %arg24[%c0_92, %c0_93, %c0_94] : memref<1x2x64xf32, #tpu.memory_space<vmem>>, vector<1x2x64xf32>
    %214 = vector.shape_cast %213 : vector<1x2x64xf32> to vector<2x64xf32>
    %215 = vector.shape_cast %212 : vector<2x64xf32> to vector<1x2x64xf32>
    tpu.vector_store %arg24[%c0_92, %c0_93, %c0_94], %215 {strides = array<i32>} : memref<1x2x64xf32, #tpu.memory_space<vmem>>, vector<1x2x64xf32>,
    return
  }
  func.func @transform_0(%arg0: i32) -> (i32, i32, i32) {
    %c0_i32 = arith.constant 0 : i32
    %c0_i32_0 = arith.constant 0 : i32
    %c0_i32_1 = arith.constant 0 : i32
    return %arg0, %c0_i32, %c0_i32_0 : i32, i32, i32
  }
  func.func @transform_1(%arg0: i32) -> (i32, i32, i32) {
    %c0_i32 = arith.constant 0 : i32
    %c0_i32_0 = arith.constant 0 : i32
    %c0_i32_1 = arith.constant 0 : i32
    return %arg0, %c0_i32, %c0_i32_0 : i32, i32, i32
  }
  func.func @transform_2(%arg0: i32) -> (i32, i32, i32) {
    %c0_i32 = arith.constant 0 : i32
    %c0_i32_0 = arith.constant 0 : i32
    %c0_i32_1 = arith.constant 0 : i32
    return %arg0, %c0_i32, %c0_i32_0 : i32, i32, i32
  }
  func.func @transform_3(%arg0: i32) -> (i32, i32, i32) {
    %c0_i32 = arith.constant 0 : i32
    %c0_i32_0 = arith.constant 0 : i32
    %c0_i32_1 = arith.constant 0 : i32
    return %arg0, %c0_i32, %c0_i32_0 : i32, i32, i32
  }
  func.func @transform_4(%arg0: i32) -> (i32, i32, i32) {
    %c0_i32 = arith.constant 0 : i32
    %c0_i32_0 = arith.constant 0 : i32
    %c0_i32_1 = arith.constant 0 : i32
    return %arg0, %c0_i32, %c0_i32_0 : i32, i32, i32
  }
  func.func @transform_5(%arg0: i32) -> (i32, i32) {
    %c0_i32 = arith.constant 0 : i32
    %c0_i32_0 = arith.constant 0 : i32
    %c0_i32_1 = arith.constant 0 : i32
    return %c0_i32, %c0_i32_0 : i32, i32
  }
  func.func @transform_6(%arg0: i32) -> (i32, i32) {
    %c0_i32 = arith.constant 0 : i32
    %c0_i32_0 = arith.constant 0 : i32
    %c0_i32_1 = arith.constant 0 : i32
    return %c0_i32, %c0_i32_0 : i32, i32
  }
  func.func @transform_7(%arg0: i32) -> (i32, i32) {
    %c0_i32 = arith.constant 0 : i32
    %c0_i32_0 = arith.constant 0 : i32
    %c0_i32_1 = arith.constant 0 : i32
    return %c0_i32, %c0_i32_0 : i32, i32
  }
  func.func @transform_8(%arg0: i32) -> (i32, i32) {
    %c0_i32 = arith.constant 0 : i32
    %c0_i32_0 = arith.constant 0 : i32
    %c0_i32_1 = arith.constant 0 : i32
    return %c0_i32, %c0_i32_0 : i32, i32
  }
  func.func @transform_9(%arg0: i32) -> (i32, i32) {
    %c0_i32 = arith.constant 0 : i32
    %c0_i32_0 = arith.constant 0 : i32
    %c0_i32_1 = arith.constant 0 : i32
    return %c0_i32, %c0_i32_0 : i32, i32
  }
  func.func @transform_10(%arg0: i32) -> (i32, i32) {
    %c0_i32 = arith.constant 0 : i32
    %c0_i32_0 = arith.constant 0 : i32
    %c0_i32_1 = arith.constant 0 : i32
    return %c0_i32, %c0_i32_0 : i32, i32
  }
  func.func @transform_11(%arg0: i32) -> (i32, i32) {
    %c0_i32 = arith.constant 0 : i32
    %c0_i32_0 = arith.constant 0 : i32
    %c0_i32_1 = arith.constant 0 : i32
    return %c0_i32, %c0_i32_0 : i32, i32
  }
  func.func @transform_12(%arg0: i32) -> (i32, i32) {
    %c0_i32 = arith.constant 0 : i32
    %c0_i32_0 = arith.constant 0 : i32
    %c0_i32_1 = arith.constant 0 : i32
    return %c0_i32, %c0_i32_0 : i32, i32
  }
  func.func @transform_13(%arg0: i32) -> (i32, i32, i32) {
    %c0_i32 = arith.constant 0 : i32
    %c0_i32_0 = arith.constant 0 : i32
    %c0_i32_1 = arith.constant 0 : i32
    return %arg0, %c0_i32, %c0_i32_0 : i32, i32, i32
  }
  func.func @transform_14(%arg0: i32) -> (i32, i32, i32) {
    %c0_i32 = arith.constant 0 : i32
    %c0_i32_0 = arith.constant 0 : i32
    %c0_i32_1 = arith.constant 0 : i32
    return %arg0, %c0_i32, %c0_i32_0 : i32, i32, i32
  }
  func.func @transform_15(%arg0: i32) -> (i32, i32, i32) {
    %c0_i32 = arith.constant 0 : i32
    %c0_i32_0 = arith.constant 0 : i32
    %c0_i32_1 = arith.constant 0 : i32
    return %arg0, %c0_i32, %c0_i32_0 : i32, i32, i32
  }
  func.func @transform_16(%arg0: i32) -> (i32, i32, i32) {
    %c0_i32 = arith.constant 0 : i32
    %c0_i32_0 = arith.constant 0 : i32
    %c0_i32_1 = arith.constant 0 : i32
    return %arg0, %c0_i32, %c0_i32_0 : i32, i32, i32
  }
  func.func @transform_17(%arg0: i32) -> (i32, i32, i32) {
    %c0_i32 = arith.constant 0 : i32
    %c0_i32_0 = arith.constant 0 : i32
    %c0_i32_1 = arith.constant 0 : i32
    return %arg0, %c0_i32, %c0_i32_0 : i32, i32, i32
  }
  func.func @transform_18(%arg0: i32) -> (i32, i32, i32) {
    %c0_i32 = arith.constant 0 : i32
    %c0_i32_0 = arith.constant 0 : i32
    %c0_i32_1 = arith.constant 0 : i32
    return %arg0, %c0_i32, %c0_i32_0 : i32, i32, i32
  }
  func.func @transform_19(%arg0: i32) -> (i32, i32, i32) {
    %c0_i32 = arith.constant 0 : i32
    %c0_i32_0 = arith.constant 0 : i32
    %c0_i32_1 = arith.constant 0 : i32
    return %arg0, %c0_i32, %c0_i32_0 : i32, i32, i32
  }
  func.func @transform_20(%arg0: i32) -> (i32, i32, i32) {
    %c0_i32 = arith.constant 0 : i32
    %c0_i32_0 = arith.constant 0 : i32
    %c0_i32_1 = arith.constant 0 : i32
    return %arg0, %c0_i32, %c0_i32_0 : i32, i32, i32
  }
  func.func @transform_21(%arg0: i32) -> (i32, i32, i32) {
    %c0_i32 = arith.constant 0 : i32
    %c0_i32_0 = arith.constant 0 : i32
    %c0_i32_1 = arith.constant 0 : i32
    return %arg0, %c0_i32, %c0_i32_0 : i32, i32, i32
  }
  func.func @transform_22(%arg0: i32) -> (i32, i32, i32) {
    %c0_i32 = arith.constant 0 : i32
    %c0_i32_0 = arith.constant 0 : i32
    %c0_i32_1 = arith.constant 0 : i32
    return %arg0, %c0_i32, %c0_i32_0 : i32, i32, i32
  }
  func.func @transform_23(%arg0: i32) -> (i32, i32, i32) {
    %c0_i32 = arith.constant 0 : i32
    %c0_i32_0 = arith.constant 0 : i32
    %c0_i32_1 = arith.constant 0 : i32
    return %arg0, %c0_i32, %c0_i32_0 : i32, i32, i32
  }
}

</mosaic_0001>

<llo_original>
// kernel: tpu_custom_call.1
$region0: #{tpu_custom_call.1}
  #allocation0 [shape = 'u32[]', space=smem, size = 0x4, offset = 0x4, fixed_abs, tag = 'smem constant byte address 0x4 - core index']
  #allocation1 [shape = 'u32[144,128]{1,0:T(1,128)}', space=vmem, size = 0x12000, scoped, tag = 'internal scratch']
  %s0 = inlined_call_operand.vmem [shape: f32[2,12,1], index: 0, kind: input, shape index: {}]
  %s1 = inlined_call_operand.vmem [shape: f32[2,32,1], index: 1, kind: input, shape index: {}]
  %s2 = inlined_call_operand.vmem [shape: s32[2,32,1], index: 2, kind: input, shape index: {}]
  %s3 = inlined_call_operand.vmem [shape: s32[2,1,32], index: 3, kind: input, shape index: {}]
  %s4 = inlined_call_operand.vmem [shape: s32[2,1,12], index: 4, kind: input, shape index: {}]
  %s5 = inlined_call_operand.vmem [shape: f32[1,32], index: 5, kind: input, shape index: {}]
  %s6 = inlined_call_operand.vmem [shape: f32[1,32], index: 6, kind: input, shape index: {}]
  %s7 = inlined_call_operand.vmem [shape: f32[32,32], index: 7, kind: input, shape index: {}]
  %s8 = inlined_call_operand.vmem [shape: f32[1,32], index: 8, kind: input, shape index: {}]
  %s9 = inlined_call_operand.vmem [shape: f32[1,32], index: 9, kind: input, shape index: {}]
  %s10 = inlined_call_operand.vmem [shape: f32[1,32], index: 10, kind: input, shape index: {}]
  %s11 = inlined_call_operand.hbm [shape: f32[32,32], index: 11, kind: input, shape index: {}]
  %s12 = inlined_call_operand.vmem [shape: f32[1,32], index: 12, kind: input, shape index: {}]
  %s13 = inlined_call_operand.vmem [shape: f32[2,32,192], index: 13, kind: input, shape index: {}]
  %s14 = inlined_call_operand.vmem [shape: f32[2,1,192], index: 14, kind: input, shape index: {}]
  %s15 = inlined_call_operand.hbm [shape: f32[2,32,64], index: 15, kind: input, shape index: {}]
  %s16 = inlined_call_operand.vmem [shape: f32[2,1,64], index: 16, kind: input, shape index: {}]
  %s17 = inlined_call_operand.hbm [shape: f32[2,64,64], index: 17, kind: input, shape index: {}]
  %s18 = inlined_call_operand.vmem [shape: f32[2,1,64], index: 18, kind: input, shape index: {}]
  %s19 = inlined_call_operand.hbm [shape: f32[2,64,64], index: 19, kind: input, shape index: {}]
  %s20 = inlined_call_operand.vmem [shape: f32[2,1,64], index: 20, kind: input, shape index: {}]
  %s21 = inlined_call_operand.hbm [shape: f32[2,64,64], index: 21, kind: input, shape index: {}]
  %s22 = inlined_call_operand.vmem [shape: f32[2,1,64], index: 22, kind: input, shape index: {}]
  %s23 = inlined_call_operand.hbm [shape: f32[2,2,64], index: 23, kind: output, shape index: {}]
  %s24 = sld [smem:[#allocation0]]
  $region145: #{tpu_custom_call.1} parent=0
    _
  %s26 = ssub.s32 1, %s24
  %s27 = scalar_select 0, %s26, %s24
  $region1: #{tpu_custom_call.1} parent=0
    #allocation2 [shape = 'u8[16384]{0}', space=vmem, size = 0x4000, scoped, tag = 'input window, operand 11, single buffered']
    #allocation3 [shape = 's32[2]{0}', space=sflag, size = 0x8, scoped, tag = 'scoped memory for tpu_custom_call.1']
    #allocation4 [shape = 's32[2]{0}', space=sflag, size = 0x8, scoped, tag = 'scoped memory for tpu_custom_call.1']
    #allocation5 [shape = 'u8[32768]{0}', space=vmem, size = 0x8000, scoped, tag = 'input window, operand 15']
    #allocation6 [shape = 's32[2]{0}', space=sflag, size = 0x8, scoped, tag = 'scoped memory for tpu_custom_call.1']
    #allocation7 [shape = 'u8[65536]{0}', space=vmem, size = 0x10000, scoped, tag = 'input window, operand 17']
    #allocation8 [shape = 'u8[65536]{0}', space=vmem, size = 0x10000, scoped, tag = 'input window, operand 19']
    #allocation9 [shape = 's32[2]{0}', space=sflag, size = 0x8, scoped, tag = 'scoped memory for tpu_custom_call.1']
    #allocation10 [shape = 'u8[65536]{0}', space=vmem, size = 0x10000, scoped, tag = 'input window, operand 21']
    #allocation11 [shape = 'u8[2048]{0}', space=vmem, size = 0x800, scoped, tag = 'output window, operand 0']
    %28 = vsyncpa [#allocation3], 0
    %29 = vsyncpa [#allocation6], 0
    %s30 = scalar_lea.sflag [#allocation6], 1
    %31 = vsyncpa %s30, 0
    %32 = vsyncpa [#allocation9], 0
    %s33 = scalar_lea.sflag [#allocation9], 1
    %34 = vsyncpa %s33, 0
    %35 = vsyncpa [#allocation4], 0
    %s36 = scalar_lea.sflag [#allocation4], 1
    %37 = vsyncpa %s36, 0
    loop: start=0, step=1, limit=4
    $region2: #{tpu_custom_call.1} parent=1 // loop_pre_header
      _
    $region3: #{tpu_custom_call.1} parent=1 // loop_header
      %s39 = sphi 0, %s43
      %p40 = scmp.ge.s32.totalorder %s39, 4
      %s49 = sphi 0, %s51
      %s52 = sphi 0, %s49
      %s53 = sphi 0, %s52
      %s69 = sphi 0, %s53
      %s75 = sphi 0, %s77
      %s78 = sphi 0, %s75
      %s79 = sphi 0, %s78
      %s95 = sphi 0, %s79
      %s101 = sphi 0, %s103
      %s104 = sphi 0, %s101
      %s105 = sphi 0, %s104
      %s121 = sphi 0, %s105
      %s127 = sphi 0, %s129
      %s130 = sphi 0, %s127
      %s131 = sphi 0, %s130
      %s147 = sphi 0, %s131
      %s153 = sphi 0, %s155
      %s156 = sphi 0, %s153
      %s157 = sphi 0, %s156
      %s173 = sphi 0, %s157
      %s177 = sphi 0, %s177
      %s179 = sphi 0, %s177
      %s180 = sphi 0, %s179
      %s194 = sphi 0, %s180
      %s198 = sphi 0, %s198
      %s200 = sphi 0, %s198
      %s201 = sphi 0, %s200
      %s215 = sphi 0, %s201
      %s219 = sphi 0, %s219
      %s221 = sphi 0, %s219
      %s222 = sphi 0, %s221
      %s236 = sphi 0, %s222
      %s240 = sphi 0, %s240
      %s242 = sphi 0, %s240
      %s243 = sphi 0, %s242
      %s257 = sphi 0, %s243
      %s261 = sphi 0, %s261
      %s263 = sphi 0, %s261
      %s264 = sphi 0, %s263
      %s278 = sphi 0, %s264
      %s282 = sphi 0, %s282
      %s284 = sphi 0, %s282
      %s285 = sphi 0, %s284
      %s299 = sphi 0, %s285
      %s303 = sphi 0, %s303
      %s305 = sphi 0, %s303
      %s306 = sphi 0, %s305
      %s320 = sphi 0, %s306
      %s324 = sphi 0, %s324
      %s326 = sphi 0, %s324
      %s327 = sphi 0, %s326
      %s341 = sphi 0, %s327
      %s347 = sphi 0, %s349
      %s350 = sphi 0, %s347
      %s351 = sphi 0, %s350
      %s367 = sphi 0, %s351
      %s373 = sphi 0, %s375
      %s376 = sphi 0, %s373
      %s377 = sphi 0, %s376
      %s393 = sphi 0, %s377
      %s399 = sphi 0, %s401
      %s402 = sphi 0, %s399
      %s403 = sphi 0, %s402
      %s419 = sphi 0, %s403
      %s425 = sphi 0, %s427
      %s428 = sphi 0, %s425
      %s429 = sphi 0, %s428
      %s445 = sphi 0, %s429
      %s451 = sphi 0, %s453
      %s454 = sphi 0, %s451
      %s455 = sphi 0, %s454
      %s471 = sphi 0, %s455
      %s477 = sphi 0, %s479
      %s480 = sphi 0, %s477
      %s481 = sphi 0, %s480
      %s497 = sphi 0, %s481
      %s503 = sphi 0, %s505
      %s506 = sphi 0, %s503
      %s507 = sphi 0, %s506
      %s523 = sphi 0, %s507
      %s529 = sphi 0, %s531
      %s532 = sphi 0, %s529
      %s533 = sphi 0, %s532
      %s549 = sphi 0, %s533
      %s555 = sphi 0, %s557
      %s558 = sphi 0, %s555
      %s559 = sphi 0, %s558
      %s575 = sphi 0, %s559
      %s581 = sphi 0, %s583
      %s584 = sphi 0, %s581
      %s585 = sphi 0, %s584
      %s601 = sphi 0, %s585
      %s607 = sphi 0, %s609
      %s610 = sphi 0, %s607
      %s611 = sphi 0, %s610
      %s627 = sphi 0, %s611
    $region4: #{tpu_custom_call.1} parent=1 // loop_header_branch
      %42 = sbr.rel (%p40) target = $region8
    $region5: #{tpu_custom_call.1} parent=1 // loop_body
      %s44 = ssub.s32 %s39, 1
      %s45 = ssub.s32 %s39, 2
      %s46 = sadd.s32 %s39, 1
      %s47 = ssub.s32 %s39, %s46
      %p48 = scmp.eq.s32.totalorder %s47, 0
      %s50 = sadd.s32 %s49, 1
      %s51 = scalar_select %p48, %s49, %s50
      %p54 = pneg %p48
      %p55 = scmp.eq.s32.totalorder %s39, 1
      %p56 = por %p54, %p55
      %p57 = scmp.ne.s32.totalorder %s49, %s52
      %p58 = scmp.eq.s32.totalorder %s39, 0
      %p59 = por %p57, %p58
      %p60 = scmp.ne.s32.totalorder %s49, %s52
      %p61 = scmp.eq.s32.totalorder %s44, 1
      %p62 = por %p60, %p61
      %p63 = scmp.ne.s32.totalorder %s52, %s53
      %p64 = scmp.eq.s32.totalorder %s44, 0
      %p65 = por %p63, %p64
      %p66 = scmp.ne.s32.totalorder %s52, %s53
      %p67 = scmp.eq.s32.totalorder %s45, 1
      %p68 = por %p66, %p67
      %p70 = scmp.ne.s32.totalorder %s53, %s69
      %p71 = scmp.eq.s32.totalorder %s45, 0
      %p72 = por %p70, %p71
      %s73 = ssub.s32 %s39, %s46
      %p74 = scmp.eq.s32.totalorder %s73, 0
      %s76 = sadd.s32 %s75, 1
      %s77 = scalar_select %p74, %s75, %s76
      %p80 = pneg %p74
      %p81 = scmp.eq.s32.totalorder %s39, 1
      %p82 = por %p80, %p81
      %p83 = scmp.ne.s32.totalorder %s75, %s78
      %p84 = scmp.eq.s32.totalorder %s39, 0
      %p85 = por %p83, %p84
      %p86 = scmp.ne.s32.totalorder %s75, %s78
      %p87 = scmp.eq.s32.totalorder %s44, 1
      %p88 = por %p86, %p87
      %p89 = scmp.ne.s32.totalorder %s78, %s79
      %p90 = scmp.eq.s32.totalorder %s44, 0
      %p91 = por %p89, %p90
      %p92 = scmp.ne.s32.totalorder %s78, %s79
      %p93 = scmp.eq.s32.totalorder %s45, 1
      %p94 = por %p92, %p93
      %p96 = scmp.ne.s32.totalorder %s79, %s95
      %p97 = scmp.eq.s32.totalorder %s45, 0
      %p98 = por %p96, %p97
      %s99 = ssub.s32 %s39, %s46
      %p100 = scmp.eq.s32.totalorder %s99, 0
      %s102 = sadd.s32 %s101, 1
      %s103 = scalar_select %p100, %s101, %s102
      %p106 = pneg %p100
      %p107 = scmp.eq.s32.totalorder %s39, 1
      %p108 = por %p106, %p107
      %p109 = scmp.ne.s32.totalorder %s101, %s104
      %p110 = scmp.eq.s32.totalorder %s39, 0
      %p111 = por %p109, %p110
      %p112 = scmp.ne.s32.totalorder %s101, %s104
      %p113 = scmp.eq.s32.totalorder %s44, 1
      %p114 = por %p112, %p113
      %p115 = scmp.ne.s32.totalorder %s104, %s105
      %p116 = scmp.eq.s32.totalorder %s44, 0
      %p117 = por %p115, %p116
      %p118 = scmp.ne.s32.totalorder %s104, %s105
      %p119 = scmp.eq.s32.totalorder %s45, 1
      %p120 = por %p118, %p119
      %p122 = scmp.ne.s32.totalorder %s105, %s121
      %p123 = scmp.eq.s32.totalorder %s45, 0
      %p124 = por %p122, %p123
      %s125 = ssub.s32 %s39, %s46
      %p126 = scmp.eq.s32.totalorder %s125, 0
      %s128 = sadd.s32 %s127, 1
      %s129 = scalar_select %p126, %s127, %s128
      %p132 = pneg %p126
      %p133 = scmp.eq.s32.totalorder %s39, 1
      %p134 = por %p132, %p133
      %p135 = scmp.ne.s32.totalorder %s127, %s130
      %p136 = scmp.eq.s32.totalorder %s39, 0
      %p137 = por %p135, %p136
      %p138 = scmp.ne.s32.totalorder %s127, %s130
      %p139 = scmp.eq.s32.totalorder %s44, 1
      %p140 = por %p138, %p139
      %p141 = scmp.ne.s32.totalorder %s130, %s131
      %p142 = scmp.eq.s32.totalorder %s44, 0
      %p143 = por %p141, %p142
      %p144 = scmp.ne.s32.totalorder %s130, %s131
      %p145 = scmp.eq.s32.totalorder %s45, 1
      %p146 = por %p144, %p145
      %p148 = scmp.ne.s32.totalorder %s131, %s147
      %p149 = scmp.eq.s32.totalorder %s45, 0
      %p150 = por %p148, %p149
      %s151 = ssub.s32 %s39, %s46
      %p152 = scmp.eq.s32.totalorder %s151, 0
      %s154 = sadd.s32 %s153, 1
      %s155 = scalar_select %p152, %s153, %s154
      %p158 = pneg %p152
      %p159 = scmp.eq.s32.totalorder %s39, 1
      %p160 = por %p158, %p159
      %p161 = scmp.ne.s32.totalorder %s153, %s156
      %p162 = scmp.eq.s32.totalorder %s39, 0
      %p163 = por %p161, %p162
      %p164 = scmp.ne.s32.totalorder %s153, %s156
      %p165 = scmp.eq.s32.totalorder %s44, 1
      %p166 = por %p164, %p165
      %p167 = scmp.ne.s32.totalorder %s156, %s157
      %p168 = scmp.eq.s32.totalorder %s44, 0
      %p169 = por %p167, %p168
      %p170 = scmp.ne.s32.totalorder %s156, %s157
      %p171 = scmp.eq.s32.totalorder %s45, 1
      %p172 = por %p170, %p171
      %p174 = scmp.ne.s32.totalorder %s157, %s173
      %p175 = scmp.eq.s32.totalorder %s45, 0
      %p176 = por %p174, %p175
      %s178 = sadd.s32 %s177, 1
      %p181 = scmp.eq.s32.totalorder %s39, 1
      %p182 = scmp.ne.s32.totalorder %s177, %s179
      %p183 = scmp.eq.s32.totalorder %s39, 0
      %p184 = por %p182, %p183
      %p185 = scmp.ne.s32.totalorder %s177, %s179
      %p186 = scmp.eq.s32.totalorder %s44, 1
      %p187 = por %p185, %p186
      %p188 = scmp.ne.s32.totalorder %s179, %s180
      %p189 = scmp.eq.s32.totalorder %s44, 0
      %p190 = por %p188, %p189
      %p191 = scmp.ne.s32.totalorder %s179, %s180
      %p192 = scmp.eq.s32.totalorder %s45, 1
      %p193 = por %p191, %p192
      %p195 = scmp.ne.s32.totalorder %s180, %s194
      %p196 = scmp.eq.s32.totalorder %s45, 0
      %p197 = por %p195, %p196
      %s199 = sadd.s32 %s198, 1
      %p202 = scmp.eq.s32.totalorder %s39, 1
      %p203 = scmp.ne.s32.totalorder %s198, %s200
      %p204 = scmp.eq.s32.totalorder %s39, 0
      %p205 = por %p203, %p204
      %p206 = scmp.ne.s32.totalorder %s198, %s200
      %p207 = scmp.eq.s32.totalorder %s44, 1
      %p208 = por %p206, %p207
      %p209 = scmp.ne.s32.totalorder %s200, %s201
      %p210 = scmp.eq.s32.totalorder %s44, 0
      %p211 = por %p209, %p210
      %p212 = scmp.ne.s32.totalorder %s200, %s201
      %p213 = scmp.eq.s32.totalorder %s45, 1
      %p214 = por %p212, %p213
      %p216 = scmp.ne.s32.totalorder %s201, %s215
      %p217 = scmp.eq.s32.totalorder %s45, 0
      %p218 = por %p216, %p217
      %s220 = sadd.s32 %s219, 1
      %p223 = scmp.eq.s32.totalorder %s39, 1
      %p224 = scmp.ne.s32.totalorder %s219, %s221
      %p225 = scmp.eq.s32.totalorder %s39, 0
      %p226 = por %p224, %p225
      %p227 = scmp.ne.s32.totalorder %s219, %s221
      %p228 = scmp.eq.s32.totalorder %s44, 1
      %p229 = por %p227, %p228
      %p230 = scmp.ne.s32.totalorder %s221, %s222
      %p231 = scmp.eq.s32.totalorder %s44, 0
      %p232 = por %p230, %p231
      %p233 = scmp.ne.s32.totalorder %s221, %s222
      %p234 = scmp.eq.s32.totalorder %s45, 1
      %p235 = por %p233, %p234
      %p237 = scmp.ne.s32.totalorder %s222, %s236
      %p238 = scmp.eq.s32.totalorder %s45, 0
      %p239 = por %p237, %p238
      %s241 = sadd.s32 %s240, 1
      %p244 = scmp.eq.s32.totalorder %s39, 1
      %p245 = scmp.ne.s32.totalorder %s240, %s242
      %p246 = scmp.eq.s32.totalorder %s39, 0
      %p247 = por %p245, %p246
      %p248 = scmp.ne.s32.totalorder %s240, %s242
      %p249 = scmp.eq.s32.totalorder %s44, 1
      %p250 = por %p248, %p249
      %p251 = scmp.ne.s32.totalorder %s242, %s243
      %p252 = scmp.eq.s32.totalorder %s44, 0
      %p253 = por %p251, %p252
      %p254 = scmp.ne.s32.totalorder %s242, %s243
      %p255 = scmp.eq.s32.totalorder %s45, 1
      %p256 = por %p254, %p255
      %p258 = scmp.ne.s32.totalorder %s243, %s257
      %p259 = scmp.eq.s32.totalorder %s45, 0
      %p260 = por %p258, %p259
      %s262 = sadd.s32 %s261, 1
      %p265 = scmp.eq.s32.totalorder %s39, 1
      %p266 = scmp.ne.s32.totalorder %s261, %s263
      %p267 = scmp.eq.s32.totalorder %s39, 0
      %p268 = por %p266, %p267
      %p269 = scmp.ne.s32.totalorder %s261, %s263
      %p270 = scmp.eq.s32.totalorder %s44, 1
      %p271 = por %p269, %p270
      %p272 = scmp.ne.s32.totalorder %s263, %s264
      %p273 = scmp.eq.s32.totalorder %s44, 0
      %p274 = por %p272, %p273
      %p275 = scmp.ne.s32.totalorder %s263, %s264
      %p276 = scmp.eq.s32.totalorder %s45, 1
      %p277 = por %p275, %p276
      %p279 = scmp.ne.s32.totalorder %s264, %s278
      %p280 = scmp.eq.s32.totalorder %s45, 0
      %p281 = por %p279, %p280
      %s283 = sadd.s32 %s282, 1
      %p286 = scmp.eq.s32.totalorder %s39, 1
      %p287 = scmp.ne.s32.totalorder %s282, %s284
      %p288 = scmp.eq.s32.totalorder %s39, 0
      %p289 = por %p287, %p288
      %p290 = scmp.ne.s32.totalorder %s282, %s284
      %p291 = scmp.eq.s32.totalorder %s44, 1
      %p292 = por %p290, %p291
      %p293 = scmp.ne.s32.totalorder %s284, %s285
      %p294 = scmp.eq.s32.totalorder %s44, 0
      %p295 = por %p293, %p294
      %p296 = scmp.ne.s32.totalorder %s284, %s285
      %p297 = scmp.eq.s32.totalorder %s45, 1
      %p298 = por %p296, %p297
      %p300 = scmp.ne.s32.totalorder %s285, %s299
      %p301 = scmp.eq.s32.totalorder %s45, 0
      %p302 = por %p300, %p301
      %s304 = sadd.s32 %s303, 1
      %p307 = scmp.eq.s32.totalorder %s39, 1
      %p308 = scmp.ne.s32.totalorder %s303, %s305
      %p309 = scmp.eq.s32.totalorder %s39, 0
      %p310 = por %p308, %p309
      %p311 = scmp.ne.s32.totalorder %s303, %s305
      %p312 = scmp.eq.s32.totalorder %s44, 1
      %p313 = por %p311, %p312
      %p314 = scmp.ne.s32.totalorder %s305, %s306
      %p315 = scmp.eq.s32.totalorder %s44, 0
      %p316 = por %p314, %p315
      %p317 = scmp.ne.s32.totalorder %s305, %s306
      %p318 = scmp.eq.s32.totalorder %s45, 1
      %p319 = por %p317, %p318
      %p321 = scmp.ne.s32.totalorder %s306, %s320
      %p322 = scmp.eq.s32.totalorder %s45, 0
      %p323 = por %p321, %p322
      %s325 = sadd.s32 %s324, 1
      %p328 = scmp.eq.s32.totalorder %s39, 1
      %p329 = scmp.ne.s32.totalorder %s324, %s326
      %p330 = scmp.eq.s32.totalorder %s39, 0
      %p331 = por %p329, %p330
      %p332 = scmp.ne.s32.totalorder %s324, %s326
      %p333 = scmp.eq.s32.totalorder %s44, 1
      %p334 = por %p332, %p333
      %p335 = scmp.ne.s32.totalorder %s326, %s327
      %p336 = scmp.eq.s32.totalorder %s44, 0
      %p337 = por %p335, %p336
      %p338 = scmp.ne.s32.totalorder %s326, %s327
      %p339 = scmp.eq.s32.totalorder %s45, 1
      %p340 = por %p338, %p339
      %p342 = scmp.ne.s32.totalorder %s327, %s341
      %p343 = scmp.eq.s32.totalorder %s45, 0
      %p344 = por %p342, %p343
      %s345 = ssub.s32 %s39, %s46
      %p346 = scmp.eq.s32.totalorder %s345, 0
      %s348 = sadd.s32 %s347, 1
      %s349 = scalar_select %p346, %s347, %s348
      %p352 = pneg %p346
      %p353 = scmp.eq.s32.totalorder %s39, 1
      %p354 = por %p352, %p353
      %p355 = scmp.ne.s32.totalorder %s347, %s350
      %p356 = scmp.eq.s32.totalorder %s39, 0
      %p357 = por %p355, %p356
      %p358 = scmp.ne.s32.totalorder %s347, %s350
      %p359 = scmp.eq.s32.totalorder %s44, 1
      %p360 = por %p358, %p359
      %p361 = scmp.ne.s32.totalorder %s350, %s351
      %p362 = scmp.eq.s32.totalorder %s44, 0
      %p363 = por %p361, %p362
      %p364 = scmp.ne.s32.totalorder %s350, %s351
      %p365 = scmp.eq.s32.totalorder %s45, 1
      %p366 = por %p364, %p365
      %p368 = scmp.ne.s32.totalorder %s351, %s367
      %p369 = scmp.eq.s32.totalorder %s45, 0
      %p370 = por %p368, %p369
      %s371 = ssub.s32 %s39, %s46
      %p372 = scmp.eq.s32.totalorder %s371, 0
      %s374 = sadd.s32 %s373, 1
      %s375 = scalar_select %p372, %s373, %s374
      %p378 = pneg %p372
      %p379 = scmp.eq.s32.totalorder %s39, 1
      %p380 = por %p378, %p379
      %p381 = scmp.ne.s32.totalorder %s373, %s376
      %p382 = scmp.eq.s32.totalorder %s39, 0
      %p383 = por %p381, %p382
      %p384 = scmp.ne.s32.totalorder %s373, %s376
      %p385 = scmp.eq.s32.totalorder %s44, 1
      %p386 = por %p384, %p385
      %p387 = scmp.ne.s32.totalorder %s376, %s377
      %p388 = scmp.eq.s32.totalorder %s44, 0
      %p389 = por %p387, %p388
      %p390 = scmp.ne.s32.totalorder %s376, %s377
      %p391 = scmp.eq.s32.totalorder %s45, 1
      %p392 = por %p390, %p391
      %p394 = scmp.ne.s32.totalorder %s377, %s393
      %p395 = scmp.eq.s32.totalorder %s45, 0
      %p396 = por %p394, %p395
      %s397 = ssub.s32 %s39, %s46
      %p398 = scmp.eq.s32.totalorder %s397, 0
      %s400 = sadd.s32 %s399, 1
      %s401 = scalar_select %p398, %s399, %s400
      %p404 = pneg %p398
      %p405 = scmp.eq.s32.totalorder %s39, 1
      %p406 = por %p404, %p405
      %p407 = scmp.ne.s32.totalorder %s399, %s402
      %p408 = scmp.eq.s32.totalorder %s39, 0
      %p409 = por %p407, %p408
      %p410 = scmp.ne.s32.totalorder %s399, %s402
      %p411 = scmp.eq.s32.totalorder %s44, 1
      %p412 = por %p410, %p411
      %p413 = scmp.ne.s32.totalorder %s402, %s403
      %p414 = scmp.eq.s32.totalorder %s44, 0
      %p415 = por %p413, %p414
      %p416 = scmp.ne.s32.totalorder %s402, %s403
      %p417 = scmp.eq.s32.totalorder %s45, 1
      %p418 = por %p416, %p417
      %p420 = scmp.ne.s32.totalorder %s403, %s419
      %p421 = scmp.eq.s32.totalorder %s45, 0
      %p422 = por %p420, %p421
      %s423 = ssub.s32 %s39, %s46
      %p424 = scmp.eq.s32.totalorder %s423, 0
      %s426 = sadd.s32 %s425, 1
      %s427 = scalar_select %p424, %s425, %s426
      %p430 = pneg %p424
      %p431 = scmp.eq.s32.totalorder %s39, 1
      %p432 = por %p430, %p431
      %p433 = scmp.ne.s32.totalorder %s425, %s428
      %p434 = scmp.eq.s32.totalorder %s39, 0
      %p435 = por %p433, %p434
      %p436 = scmp.ne.s32.totalorder %s425, %s428
      %p437 = scmp.eq.s32.totalorder %s44, 1
      %p438 = por %p436, %p437
      %p439 = scmp.ne.s32.totalorder %s428, %s429
      %p440 = scmp.eq.s32.totalorder %s44, 0
      %p441 = por %p439, %p440
      %p442 = scmp.ne.s32.totalorder %s428, %s429
      %p443 = scmp.eq.s32.totalorder %s45, 1
      %p444 = por %p442, %p443
      %p446 = scmp.ne.s32.totalorder %s429, %s445
      %p447 = scmp.eq.s32.totalorder %s45, 0
      %p448 = por %p446, %p447
      %s449 = ssub.s32 %s39, %s46
      %p450 = scmp.eq.s32.totalorder %s449, 0
      %s452 = sadd.s32 %s451, 1
      %s453 = scalar_select %p450, %s451, %s452
      %p456 = pneg %p450
      %p457 = scmp.eq.s32.totalorder %s39, 1
      %p458 = por %p456, %p457
      %p459 = scmp.ne.s32.totalorder %s451, %s454
      %p460 = scmp.eq.s32.totalorder %s39, 0
      %p461 = por %p459, %p460
      %p462 = scmp.ne.s32.totalorder %s451, %s454
      %p463 = scmp.eq.s32.totalorder %s44, 1
      %p464 = por %p462, %p463
      %p465 = scmp.ne.s32.totalorder %s454, %s455
      %p466 = scmp.eq.s32.totalorder %s44, 0
      %p467 = por %p465, %p466
      %p468 = scmp.ne.s32.totalorder %s454, %s455
      %p469 = scmp.eq.s32.totalorder %s45, 1
      %p470 = por %p468, %p469
      %p472 = scmp.ne.s32.totalorder %s455, %s471
      %p473 = scmp.eq.s32.totalorder %s45, 0
      %p474 = por %p472, %p473
      %s475 = ssub.s32 %s39, %s46
      %p476 = scmp.eq.s32.totalorder %s475, 0
      %s478 = sadd.s32 %s477, 1
      %s479 = scalar_select %p476, %s477, %s478
      %p482 = pneg %p476
      %p483 = scmp.eq.s32.totalorder %s39, 1
      %p484 = por %p482, %p483
      %p485 = scmp.ne.s32.totalorder %s477, %s480
      %p486 = scmp.eq.s32.totalorder %s39, 0
      %p487 = por %p485, %p486
      %p488 = scmp.ne.s32.totalorder %s477, %s480
      %p489 = scmp.eq.s32.totalorder %s44, 1
      %p490 = por %p488, %p489
      %p491 = scmp.ne.s32.totalorder %s480, %s481
      %p492 = scmp.eq.s32.totalorder %s44, 0
      %p493 = por %p491, %p492
      %p494 = scmp.ne.s32.totalorder %s480, %s481
      %p495 = scmp.eq.s32.totalorder %s45, 1
      %p496 = por %p494, %p495
      %p498 = scmp.ne.s32.totalorder %s481, %s497
      %p499 = scmp.eq.s32.totalorder %s45, 0
      %p500 = por %p498, %p499
      %s501 = ssub.s32 %s39, %s46
      %p502 = scmp.eq.s32.totalorder %s501, 0
      %s504 = sadd.s32 %s503, 1
      %s505 = scalar_select %p502, %s503, %s504
      %p508 = pneg %p502
      %p509 = scmp.eq.s32.totalorder %s39, 1
      %p510 = por %p508, %p509
      %p511 = scmp.ne.s32.totalorder %s503, %s506
      %p512 = scmp.eq.s32.totalorder %s39, 0
      %p513 = por %p511, %p512
      %p514 = scmp.ne.s32.totalorder %s503, %s506
      %p515 = scmp.eq.s32.totalorder %s44, 1
      %p516 = por %p514, %p515
      %p517 = scmp.ne.s32.totalorder %s506, %s507
      %p518 = scmp.eq.s32.totalorder %s44, 0
      %p519 = por %p517, %p518
      %p520 = scmp.ne.s32.totalorder %s506, %s507
      %p521 = scmp.eq.s32.totalorder %s45, 1
      %p522 = por %p520, %p521
      %p524 = scmp.ne.s32.totalorder %s507, %s523
      %p525 = scmp.eq.s32.totalorder %s45, 0
      %p526 = por %p524, %p525
      %s527 = ssub.s32 %s39, %s46
      %p528 = scmp.eq.s32.totalorder %s527, 0
      %s530 = sadd.s32 %s529, 1
      %s531 = scalar_select %p528, %s529, %s530
      %p534 = pneg %p528
      %p535 = scmp.eq.s32.totalorder %s39, 1
      %p536 = por %p534, %p535
      %p537 = scmp.ne.s32.totalorder %s529, %s532
      %p538 = scmp.eq.s32.totalorder %s39, 0
      %p539 = por %p537, %p538
      %p540 = scmp.ne.s32.totalorder %s529, %s532
      %p541 = scmp.eq.s32.totalorder %s44, 1
      %p542 = por %p540, %p541
      %p543 = scmp.ne.s32.totalorder %s532, %s533
      %p544 = scmp.eq.s32.totalorder %s44, 0
      %p545 = por %p543, %p544
      %p546 = scmp.ne.s32.totalorder %s532, %s533
      %p547 = scmp.eq.s32.totalorder %s45, 1
      %p548 = por %p546, %p547
      %p550 = scmp.ne.s32.totalorder %s533, %s549
      %p551 = scmp.eq.s32.totalorder %s45, 0
      %p552 = por %p550, %p551
      %s553 = ssub.s32 %s39, %s46
      %p554 = scmp.eq.s32.totalorder %s553, 0
      %s556 = sadd.s32 %s555, 1
      %s557 = scalar_select %p554, %s555, %s556
      %p560 = pneg %p554
      %p561 = scmp.eq.s32.totalorder %s39, 1
      %p562 = por %p560, %p561
      %p563 = scmp.ne.s32.totalorder %s555, %s558
      %p564 = scmp.eq.s32.totalorder %s39, 0
      %p565 = por %p563, %p564
      %p566 = scmp.ne.s32.totalorder %s555, %s558
      %p567 = scmp.eq.s32.totalorder %s44, 1
      %p568 = por %p566, %p567
      %p569 = scmp.ne.s32.totalorder %s558, %s559
      %p570 = scmp.eq.s32.totalorder %s44, 0
      %p571 = por %p569, %p570
      %p572 = scmp.ne.s32.totalorder %s558, %s559
      %p573 = scmp.eq.s32.totalorder %s45, 1
      %p574 = por %p572, %p573
      %p576 = scmp.ne.s32.totalorder %s559, %s575
      %p577 = scmp.eq.s32.totalorder %s45, 0
      %p578 = por %p576, %p577
      %s579 = ssub.s32 %s39, %s46
      %p580 = scmp.eq.s32.totalorder %s579, 0
      %s582 = sadd.s32 %s581, 1
      %s583 = scalar_select %p580, %s581, %s582
      %p586 = pneg %p580
      %p587 = scmp.eq.s32.totalorder %s39, 1
      %p588 = por %p586, %p587
      %p589 = scmp.ne.s32.totalorder %s581, %s584
      %p590 = scmp.eq.s32.totalorder %s39, 0
      %p591 = por %p589, %p590
      %p592 = scmp.ne.s32.totalorder %s581, %s584
      %p593 = scmp.eq.s32.totalorder %s44, 1
      %p594 = por %p592, %p593
      %p595 = scmp.ne.s32.totalorder %s584, %s585
      %p596 = scmp.eq.s32.totalorder %s44, 0
      %p597 = por %p595, %p596
      %p598 = scmp.ne.s32.totalorder %s584, %s585
      %p599 = scmp.eq.s32.totalorder %s45, 1
      %p600 = por %p598, %p599
      %p602 = scmp.ne.s32.totalorder %s585, %s601
      %p603 = scmp.eq.s32.totalorder %s45, 0
      %p604 = por %p602, %p603
      %s605 = ssub.s32 %s39, %s46
      %p606 = scmp.eq.s32.totalorder %s605, 0
      %s608 = sadd.s32 %s607, 1
      %s609 = scalar_select %p606, %s607, %s608
      %p612 = pneg %p606
      %p613 = scmp.eq.s32.totalorder %s39, 1
      %p614 = por %p612, %p613
      %p615 = scmp.ne.s32.totalorder %s607, %s610
      %p616 = scmp.eq.s32.totalorder %s39, 0
      %p617 = por %p615, %p616
      %p618 = scmp.ne.s32.totalorder %s607, %s610
      %p619 = scmp.eq.s32.totalorder %s44, 1
      %p620 = por %p618, %p619
      %p621 = scmp.ne.s32.totalorder %s610, %s611
      %p622 = scmp.eq.s32.totalorder %s44, 0
      %p623 = por %p621, %p622
      %p624 = scmp.ne.s32.totalorder %s610, %s611
      %p625 = scmp.eq.s32.totalorder %s45, 1
      %p626 = por %p624, %p625
      %p628 = scmp.ne.s32.totalorder %s611, %s627
      %p629 = scmp.eq.s32.totalorder %s45, 0
      %p630 = por %p628, %p629
      %p631 = scmp.le.s32.totalorder 1, %s39
      %p632 = scmp.lt.s32.totalorder %s39, 3
      %p633 = pnand %p631, %p632
      %p634 = pneg %p633
      // Predicated region
      $region9: #{tpu_custom_call.1} parent=5 // pred_check
        _
      $region10: #{tpu_custom_call.1} parent=5 // pred_check_branch
        %636 = sbr.rel (%p633) target = $region12
      $region11: #{tpu_custom_call.1} parent=5 // pred_region
        %s637 = ssub.s32 %s39, 1
        // Predicated region
        $region13: #{tpu_custom_call.1} parent=11 // pred_check
          %p638 = pneg %p190
        $region14: #{tpu_custom_call.1} parent=11 // pred_check_branch
          %640 = sbr.rel (%p638) target = $region16
        $region15: #{tpu_custom_call.1} parent=11 // pred_region
          _
        $region16: #{tpu_custom_call.1} parent=11 // pred_fallthru
          _
        // Predicated region
        $region17: #{tpu_custom_call.1} parent=11 // pred_check
          %p641 = pneg %p211
        $region18: #{tpu_custom_call.1} parent=11 // pred_check_branch
          %643 = sbr.rel (%p641) target = $region20
        $region19: #{tpu_custom_call.1} parent=11 // pred_region
          _
        $region20: #{tpu_custom_call.1} parent=11 // pred_fallthru
          _
        // Predicated region
        $region21: #{tpu_custom_call.1} parent=11 // pred_check
          %p644 = pneg %p232
        $region22: #{tpu_custom_call.1} parent=11 // pred_check_branch
          %646 = sbr.rel (%p644) target = $region24
        $region23: #{tpu_custom_call.1} parent=11 // pred_region
          _
        $region24: #{tpu_custom_call.1} parent=11 // pred_fallthru
          _
        // Predicated region
        $region25: #{tpu_custom_call.1} parent=11 // pred_check
          %p647 = pneg %p253
        $region26: #{tpu_custom_call.1} parent=11 // pred_check_branch
          %649 = sbr.rel (%p647) target = $region28
        $region27: #{tpu_custom_call.1} parent=11 // pred_region
          _
        $region28: #{tpu_custom_call.1} parent=11 // pred_fallthru
          _
        // Predicated region
        $region29: #{tpu_custom_call.1} parent=11 // pred_check
          %p650 = pneg %p274
        $region30: #{tpu_custom_call.1} parent=11 // pred_check_branch
          %652 = sbr.rel (%p650) target = $region32
        $region31: #{tpu_custom_call.1} parent=11 // pred_region
          _
        $region32: #{tpu_custom_call.1} parent=11 // pred_fallthru
          _
        // Predicated region
        $region33: #{tpu_custom_call.1} parent=11 // pred_check
          %p653 = pneg %p295
        $region34: #{tpu_custom_call.1} parent=11 // pred_check_branch
          %655 = sbr.rel (%p653) target = $region36
        $region35: #{tpu_custom_call.1} parent=11 // pred_region
          _
        $region36: #{tpu_custom_call.1} parent=11 // pred_fallthru
          _
        // Predicated region
        $region37: #{tpu_custom_call.1} parent=11 // pred_check
          %p656 = pneg %p316
        $region38: #{tpu_custom_call.1} parent=11 // pred_check_branch
          %658 = sbr.rel (%p656) target = $region40
        $region39: #{tpu_custom_call.1} parent=11 // pred_region
          %s660 = ssub.s32 512, 512
          %661 = vsyncadd [#allocation3], %s660
          %s662 = sshll.u32 [#allocation2], 4
          %s663 = int_to_ptr.vmem [resolvable:$true] %s662
          %668 = dma.hbm_to_vmem [thread:$0]  %s11, 512, %s663, [#allocation3], 128, 128, 8
        $region40: #{tpu_custom_call.1} parent=11 // pred_fallthru
          _
        // Predicated region
        $region41: #{tpu_custom_call.1} parent=11 // pred_check
          %p669 = pneg %p337
        $region42: #{tpu_custom_call.1} parent=11 // pred_check_branch
          %671 = sbr.rel (%p669) target = $region44
        $region43: #{tpu_custom_call.1} parent=11 // pred_region
          _
        $region44: #{tpu_custom_call.1} parent=11 // pred_fallthru
          _
      $region12: #{tpu_custom_call.1} parent=5 // pred_fallthru
        _
      %p672 = scmp.lt.s32.totalorder %s39, 2
      // Predicated region
      $region45: #{tpu_custom_call.1} parent=5 // pred_check
        %p673 = pneg %p672
      $region46: #{tpu_custom_call.1} parent=5 // pred_check_branch
        %675 = sbr.rel (%p673) target = $region48
      $region47: #{tpu_custom_call.1} parent=5 // pred_region
        // Predicated region
        $region49: #{tpu_custom_call.1} parent=47 // pred_check
          %p676 = pneg %p59
        $region50: #{tpu_custom_call.1} parent=47 // pred_check_branch
          %678 = sbr.rel (%p676) target = $region52
        $region51: #{tpu_custom_call.1} parent=47 // pred_region
          %p679 = scmp.lt.s32.totalorder %s39, 1
          %s680 = scalar_select %p679, %s39, 1
          %s681 = smul.addr %s680, 2
          %s682 = smul.addr %s681, 8
          %s683 = scalar_lea.vmem %s0, %s682
        $region52: #{tpu_custom_call.1} parent=47 // pred_fallthru
          _
        // Predicated region
        $region53: #{tpu_custom_call.1} parent=47 // pred_check
          %p684 = pneg %p85
        $region54: #{tpu_custom_call.1} parent=47 // pred_check_branch
          %686 = sbr.rel (%p684) target = $region56
        $region55: #{tpu_custom_call.1} parent=47 // pred_region
          %p687 = scmp.lt.s32.totalorder %s39, 1
          %s688 = scalar_select %p687, %s39, 1
          %s689 = smul.addr %s688, 4
          %s690 = smul.addr %s689, 8
          %s691 = scalar_lea.vmem %s1, %s690
        $region56: #{tpu_custom_call.1} parent=47 // pred_fallthru
          _
        // Predicated region
        $region57: #{tpu_custom_call.1} parent=47 // pred_check
          %p692 = pneg %p111
        $region58: #{tpu_custom_call.1} parent=47 // pred_check_branch
          %694 = sbr.rel (%p692) target = $region60
        $region59: #{tpu_custom_call.1} parent=47 // pred_region
          %p695 = scmp.lt.s32.totalorder %s39, 1
          %s696 = scalar_select %p695, %s39, 1
          %s697 = smul.addr %s696, 4
          %s698 = smul.addr %s697, 8
          %s699 = scalar_lea.vmem %s2, %s698
        $region60: #{tpu_custom_call.1} parent=47 // pred_fallthru
          _
        // Predicated region
        $region61: #{tpu_custom_call.1} parent=47 // pred_check
          %p700 = pneg %p137
        $region62: #{tpu_custom_call.1} parent=47 // pred_check_branch
          %702 = sbr.rel (%p700) target = $region64
        $region63: #{tpu_custom_call.1} parent=47 // pred_region
          %p703 = scmp.lt.s32.totalorder %s39, 1
          %s704 = scalar_select %p703, %s39, 1
          %s705 = scalar_lea.vmem %s3, %s704
        $region64: #{tpu_custom_call.1} parent=47 // pred_fallthru
          _
        // Predicated region
        $region65: #{tpu_custom_call.1} parent=47 // pred_check
          %p706 = pneg %p163
        $region66: #{tpu_custom_call.1} parent=47 // pred_check_branch
          %708 = sbr.rel (%p706) target = $region68
        $region67: #{tpu_custom_call.1} parent=47 // pred_region
          %p709 = scmp.lt.s32.totalorder %s39, 1
          %s710 = scalar_select %p709, %s39, 1
          %s711 = scalar_lea.vmem %s4, %s710
        $region68: #{tpu_custom_call.1} parent=47 // pred_fallthru
          _
        // Predicated region
        $region69: #{tpu_custom_call.1} parent=47 // pred_check
          %p712 = pneg %p357
        $region70: #{tpu_custom_call.1} parent=47 // pred_check_branch
          %714 = sbr.rel (%p712) target = $region72
        $region71: #{tpu_custom_call.1} parent=47 // pred_region
          %p715 = scmp.lt.s32.totalorder %s39, 1
          %s716 = scalar_select %p715, %s39, 1
          %s717 = smul.addr %s716, 8
          %s718 = smul.addr %s717, 8
          %s719 = scalar_lea.vmem %s13, %s718
        $region72: #{tpu_custom_call.1} parent=47 // pred_fallthru
          _
        // Predicated region
        $region73: #{tpu_custom_call.1} parent=47 // pred_check
          %p720 = pneg %p383
        $region74: #{tpu_custom_call.1} parent=47 // pred_check_branch
          %722 = sbr.rel (%p720) target = $region76
        $region75: #{tpu_custom_call.1} parent=47 // pred_region
          %p723 = scmp.lt.s32.totalorder %s39, 1
          %s724 = scalar_select %p723, %s39, 1
          %s725 = smul.addr %s724, 2
          %s726 = scalar_lea.vmem %s14, %s725
        $region76: #{tpu_custom_call.1} parent=47 // pred_fallthru
          _
        // Predicated region
        $region77: #{tpu_custom_call.1} parent=47 // pred_check
          %p727 = pneg %p409
        $region78: #{tpu_custom_call.1} parent=47 // pred_check_branch
          %729 = sbr.rel (%p727) target = $region80
        $region79: #{tpu_custom_call.1} parent=47 // pred_region
          %s730 = sand.u32 %s39, 1
          %s731 = scalar_lea.sflag [#allocation6], %s730
          %s732 = sand.u32 %s399, 1
          %s733 = smul.addr %s732, 32
          %s734 = scalar_lea.vmem [#allocation5], %s733
          %s736 = ssub.s32 512, 512
          %737 = vsyncadd %s731, %s736
          %s738 = smul.addr %s39, 4
          %s739 = smul.addr %s738, 128
          %s740 = scalar_lea.hbm %s15, %s739
          %s741 = sshll.u32 %s734, 4
          %s742 = int_to_ptr.vmem [resolvable:$true] %s741
          %747 = dma.hbm_to_vmem [thread:$0]  %s740, 512, %s742, %s731, 128, 128, 8
        $region80: #{tpu_custom_call.1} parent=47 // pred_fallthru
          _
        // Predicated region
        $region81: #{tpu_custom_call.1} parent=47 // pred_check
          %p748 = pneg %p435
        $region82: #{tpu_custom_call.1} parent=47 // pred_check_branch
          %750 = sbr.rel (%p748) target = $region84
        $region83: #{tpu_custom_call.1} parent=47 // pred_region
          %p751 = scmp.lt.s32.totalorder %s39, 1
          %s752 = scalar_select %p751, %s39, 1
          %s753 = scalar_lea.vmem %s16, %s752
        $region84: #{tpu_custom_call.1} parent=47 // pred_fallthru
          _
        // Predicated region
        $region85: #{tpu_custom_call.1} parent=47 // pred_check
          %p754 = pneg %p461
        $region86: #{tpu_custom_call.1} parent=47 // pred_check_branch
          %756 = sbr.rel (%p754) target = $region88
        $region87: #{tpu_custom_call.1} parent=47 // pred_region
          %s757 = sand.u32 %s39, 1
          %s758 = scalar_lea.sflag [#allocation6], %s757
          %s759 = sand.u32 %s451, 1
          %s760 = smul.addr %s759, 64
          %s761 = scalar_lea.vmem [#allocation7], %s760
          %s763 = ssub.s32 1024, 1024
          %764 = vsyncadd %s758, %s763
          %s765 = smul.addr %s39, 8
          %s766 = smul.addr %s765, 128
          %s767 = scalar_lea.hbm %s17, %s766
          %s768 = sshll.u32 %s761, 4
          %s769 = int_to_ptr.vmem [resolvable:$true] %s768
          %774 = dma.hbm_to_vmem [thread:$0]  %s767, 1024, %s769, %s758, 128, 128, 8
        $region88: #{tpu_custom_call.1} parent=47 // pred_fallthru
          _
        // Predicated region
        $region89: #{tpu_custom_call.1} parent=47 // pred_check
          %p775 = pneg %p487
        $region90: #{tpu_custom_call.1} parent=47 // pred_check_branch
          %777 = sbr.rel (%p775) target = $region92
        $region91: #{tpu_custom_call.1} parent=47 // pred_region
          %p778 = scmp.lt.s32.totalorder %s39, 1
          %s779 = scalar_select %p778, %s39, 1
          %s780 = scalar_lea.vmem %s18, %s779
        $region92: #{tpu_custom_call.1} parent=47 // pred_fallthru
          _
        // Predicated region
        $region93: #{tpu_custom_call.1} parent=47 // pred_check
          %p781 = pneg %p513
        $region94: #{tpu_custom_call.1} parent=47 // pred_check_branch
          %783 = sbr.rel (%p781) target = $region96
        $region95: #{tpu_custom_call.1} parent=47 // pred_region
          %s784 = sand.u32 %s39, 1
          %s785 = scalar_lea.sflag [#allocation9], %s784
          %s786 = sand.u32 %s503, 1
          %s787 = smul.addr %s786, 64
          %s788 = scalar_lea.vmem [#allocation8], %s787
          %s790 = ssub.s32 1024, 1024
          %791 = vsyncadd %s785, %s790
          %s792 = smul.addr %s39, 8
          %s793 = smul.addr %s792, 128
          %s794 = scalar_lea.hbm %s19, %s793
          %s795 = sshll.u32 %s788, 4
          %s796 = int_to_ptr.vmem [resolvable:$true] %s795
          %801 = dma.hbm_to_vmem [thread:$0]  %s794, 1024, %s796, %s785, 128, 128, 8
        $region96: #{tpu_custom_call.1} parent=47 // pred_fallthru
          _
        // Predicated region
        $region97: #{tpu_custom_call.1} parent=47 // pred_check
          %p802 = pneg %p539
        $region98: #{tpu_custom_call.1} parent=47 // pred_check_branch
          %804 = sbr.rel (%p802) target = $region100
        $region99: #{tpu_custom_call.1} parent=47 // pred_region
          %p805 = scmp.lt.s32.totalorder %s39, 1
          %s806 = scalar_select %p805, %s39, 1
          %s807 = scalar_lea.vmem %s20, %s806
        $region100: #{tpu_custom_call.1} parent=47 // pred_fallthru
          _
        // Predicated region
        $region101: #{tpu_custom_call.1} parent=47 // pred_check
          %p808 = pneg %p565
        $region102: #{tpu_custom_call.1} parent=47 // pred_check_branch
          %810 = sbr.rel (%p808) target = $region104
        $region103: #{tpu_custom_call.1} parent=47 // pred_region
          %s811 = sand.u32 %s39, 1
          %s812 = scalar_lea.sflag [#allocation9], %s811
          %s813 = sand.u32 %s555, 1
          %s814 = smul.addr %s813, 64
          %s815 = scalar_lea.vmem [#allocation10], %s814
          %s817 = ssub.s32 1024, 1024
          %818 = vsyncadd %s812, %s817
          %s819 = smul.addr %s39, 8
          %s820 = smul.addr %s819, 128
          %s821 = scalar_lea.hbm %s21, %s820
          %s822 = sshll.u32 %s815, 4
          %s823 = int_to_ptr.vmem [resolvable:$true] %s822
          %828 = dma.hbm_to_vmem [thread:$0]  %s821, 1024, %s823, %s812, 128, 128, 8
        $region104: #{tpu_custom_call.1} parent=47 // pred_fallthru
          _
        // Predicated region
        $region105: #{tpu_custom_call.1} parent=47 // pred_check
          %p829 = pneg %p591
        $region106: #{tpu_custom_call.1} parent=47 // pred_check_branch
          %831 = sbr.rel (%p829) target = $region108
        $region107: #{tpu_custom_call.1} parent=47 // pred_region
          %p832 = scmp.lt.s32.totalorder %s39, 1
          %s833 = scalar_select %p832, %s39, 1
          %s834 = scalar_lea.vmem %s22, %s833
        $region108: #{tpu_custom_call.1} parent=47 // pred_fallthru
          _
      $region48: #{tpu_custom_call.1} parent=5 // pred_fallthru
        _
      %p835 = scmp.le.s32.totalorder 1, %s39
      %p836 = scmp.lt.s32.totalorder %s39, 3
      %p837 = pnand %p835, %p836
      %p838 = pneg %p837
      // Predicated region
      $region109: #{tpu_custom_call.1} parent=5 // pred_check
        _
      $region110: #{tpu_custom_call.1} parent=5 // pred_check_branch
        %840 = sbr.rel (%p837) target = $region112
      $region111: #{tpu_custom_call.1} parent=5 // pred_region
        %s841 = ssub.s32 %s39, 1
        // Predicated region
        $region113: #{tpu_custom_call.1} parent=111 // pred_check
          %p842 = pneg %p316
        $region114: #{tpu_custom_call.1} parent=111 // pred_check_branch
          %844 = sbr.rel (%p842) target = $region116
        $region115: #{tpu_custom_call.1} parent=111 // pred_region
          %845 = dma.done [#allocation3], 512
        $region116: #{tpu_custom_call.1} parent=111 // pred_fallthru
          _
        %s846 = sand.u32 %s44, 1
        %s847 = scalar_lea.sflag [#allocation6], %s846
        %s848 = sand.u32 %s402, 1
        %s849 = smul.addr %s848, 32
        %s850 = scalar_lea.vmem [#allocation5], %s849
        // Predicated region
        $region117: #{tpu_custom_call.1} parent=111 // pred_check
          %p851 = pneg %p415
        $region118: #{tpu_custom_call.1} parent=111 // pred_check_branch
          %853 = sbr.rel (%p851) target = $region120
        $region119: #{tpu_custom_call.1} parent=111 // pred_region
          %854 = dma.done %s847, 512
        $region120: #{tpu_custom_call.1} parent=111 // pred_fallthru
          _
        %s855 = sand.u32 %s44, 1
        %s856 = scalar_lea.sflag [#allocation6], %s855
        %s857 = sand.u32 %s454, 1
        %s858 = smul.addr %s857, 64
        %s859 = scalar_lea.vmem [#allocation7], %s858
        // Predicated region
        $region121: #{tpu_custom_call.1} parent=111 // pred_check
          %p860 = pneg %p467
        $region122: #{tpu_custom_call.1} parent=111 // pred_check_branch
          %862 = sbr.rel (%p860) target = $region124
        $region123: #{tpu_custom_call.1} parent=111 // pred_region
          %863 = dma.done %s856, 1024
        $region124: #{tpu_custom_call.1} parent=111 // pred_fallthru
          _
        %s864 = sand.u32 %s44, 1
        %s865 = scalar_lea.sflag [#allocation9], %s864
        %s866 = sand.u32 %s506, 1
        %s867 = smul.addr %s866, 64
        %s868 = scalar_lea.vmem [#allocation8], %s867
        // Predicated region
        $region125: #{tpu_custom_call.1} parent=111 // pred_check
          %p869 = pneg %p519
        $region126: #{tpu_custom_call.1} parent=111 // pred_check_branch
          %871 = sbr.rel (%p869) target = $region128
        $region127: #{tpu_custom_call.1} parent=111 // pred_region
          %872 = dma.done %s865, 1024
        $region128: #{tpu_custom_call.1} parent=111 // pred_fallthru
          _
        %s873 = sand.u32 %s44, 1
        %s874 = scalar_lea.sflag [#allocation9], %s873
        %s875 = sand.u32 %s558, 1
        %s876 = smul.addr %s875, 64
        %s877 = scalar_lea.vmem [#allocation10], %s876
        // Predicated region
        $region129: #{tpu_custom_call.1} parent=111 // pred_check
          %p878 = pneg %p571
        $region130: #{tpu_custom_call.1} parent=111 // pred_check_branch
          %880 = sbr.rel (%p878) target = $region132
        $region131: #{tpu_custom_call.1} parent=111 // pred_region
          %881 = dma.done %s874, 1024
        $region132: #{tpu_custom_call.1} parent=111 // pred_fallthru
          _
        %p882 = scmp.lt.s32.totalorder %s44, 1
        %s883 = scalar_select %p882, %s44, 1
        %s884 = smul.addr %s883, 2
        %s885 = smul.addr %s884, 8
        %s886 = scalar_lea.vmem %s0, %s885
        %p887 = pneg %p65
        %p888 = pneg %p62
        %p889 = scmp.lt.s32.totalorder %s44, 1
        %s890 = scalar_select %p889, %s44, 1
        %s891 = smul.addr %s890, 4
        %s892 = smul.addr %s891, 8
        %s893 = scalar_lea.vmem %s1, %s892
        %p894 = pneg %p91
        %p895 = pneg %p88
        %p896 = scmp.lt.s32.totalorder %s44, 1
        %s897 = scalar_select %p896, %s44, 1
        %s898 = smul.addr %s897, 4
        %s899 = smul.addr %s898, 8
        %s900 = scalar_lea.vmem %s2, %s899
        %p901 = pneg %p117
        %p902 = pneg %p114
        %p903 = scmp.lt.s32.totalorder %s44, 1
        %s904 = scalar_select %p903, %s44, 1
        %s905 = scalar_lea.vmem %s3, %s904
        %p906 = pneg %p143
        %p907 = pneg %p140
        %p908 = scmp.lt.s32.totalorder %s44, 1
        %s909 = scalar_select %p908, %s44, 1
        %s910 = scalar_lea.vmem %s4, %s909
        %p911 = pneg %p169
        %p912 = pneg %p166
        %p913 = pneg %p190
        %p914 = pneg %p187
        %p915 = pneg %p211
        %p916 = pneg %p208
        %p917 = pneg %p232
        %p918 = pneg %p229
        %p919 = pneg %p253
        %p920 = pneg %p250
        %p921 = pneg %p274
        %p922 = pneg %p271
        %p923 = pneg %p295
        %p924 = pneg %p292
        %p925 = pneg %p316
        %p926 = pneg %p313
        %p927 = pneg %p337
        %p928 = pneg %p334
        %p929 = scmp.lt.s32.totalorder %s44, 1
        %s930 = scalar_select %p929, %s44, 1
        %s931 = smul.addr %s930, 8
        %s932 = smul.addr %s931, 8
        %s933 = scalar_lea.vmem %s13, %s932
        %p934 = pneg %p363
        %p935 = pneg %p360
        %p936 = scmp.lt.s32.totalorder %s44, 1
        %s937 = scalar_select %p936, %s44, 1
        %s938 = smul.addr %s937, 2
        %s939 = scalar_lea.vmem %s14, %s938
        %p940 = pneg %p389
        %p941 = pneg %p386
        %s942 = sand.u32 %s44, 1
        %s943 = scalar_lea.sflag [#allocation6], %s942
        %s944 = sand.u32 %s402, 1
        %s945 = smul.addr %s944, 32
        %s946 = scalar_lea.vmem [#allocation5], %s945
        %p947 = pneg %p415
        %p948 = pneg %p412
        %p949 = scmp.lt.s32.totalorder %s44, 1
        %s950 = scalar_select %p949, %s44, 1
        %s951 = scalar_lea.vmem %s16, %s950
        %p952 = pneg %p441
        %p953 = pneg %p438
        %s954 = sand.u32 %s44, 1
        %s955 = scalar_lea.sflag [#allocation6], %s954
        %s956 = sand.u32 %s454, 1
        %s957 = smul.addr %s956, 64
        %s958 = scalar_lea.vmem [#allocation7], %s957
        %p959 = pneg %p467
        %p960 = pneg %p464
        %p961 = scmp.lt.s32.totalorder %s44, 1
        %s962 = scalar_select %p961, %s44, 1
        %s963 = scalar_lea.vmem %s18, %s962
        %p964 = pneg %p493
        %p965 = pneg %p490
        %s966 = sand.u32 %s44, 1
        %s967 = scalar_lea.sflag [#allocation9], %s966
        %s968 = sand.u32 %s506, 1
        %s969 = smul.addr %s968, 64
        %s970 = scalar_lea.vmem [#allocation8], %s969
        %p971 = pneg %p519
        %p972 = pneg %p516
        %p973 = scmp.lt.s32.totalorder %s44, 1
        %s974 = scalar_select %p973, %s44, 1
        %s975 = scalar_lea.vmem %s20, %s974
        %p976 = pneg %p545
        %p977 = pneg %p542
        %s978 = sand.u32 %s44, 1
        %s979 = scalar_lea.sflag [#allocation9], %s978
        %s980 = sand.u32 %s558, 1
        %s981 = smul.addr %s980, 64
        %s982 = scalar_lea.vmem [#allocation10], %s981
        %p983 = pneg %p571
        %p984 = pneg %p568
        %p985 = scmp.lt.s32.totalorder %s44, 1
        %s986 = scalar_select %p985, %s44, 1
        %s987 = scalar_lea.vmem %s22, %s986
        %p988 = pneg %p597
        %p989 = pneg %p594
        %p990 = pneg %p623
        %p991 = pneg %p620
        %s992 = sand.u32 %s610, 1
        %s993 = scalar_lea.sflag [#allocation4], %s992
        %s994 = sand.u32 %s610, 1
        %s995 = smul.addr %s994, 2
        %s996 = scalar_lea.vmem [#allocation11], %s995
        %p997 = scmp.lt.s32.totalorder %s44, 1
        %s998 = scalar_select %p997, %s44, 1
        %s999 = smul.addr %s998, 2
        %s1000 = smul.addr %s999, 8
        %s1001 = scalar_lea.vmem %s0, %s1000
        %p1002 = scmp.lt.s32.totalorder %s44, 1
        %s1003 = scalar_select %p1002, %s44, 1
        %s1004 = smul.addr %s1003, 4
        %s1005 = smul.addr %s1004, 8
        %s1006 = scalar_lea.vmem %s1, %s1005
        %p1007 = scmp.lt.s32.totalorder %s44, 1
        %s1008 = scalar_select %p1007, %s44, 1
        %s1009 = smul.addr %s1008, 4
        %s1010 = smul.addr %s1009, 8
        %s1011 = scalar_lea.vmem %s2, %s1010
        %p1012 = scmp.lt.s32.totalorder %s44, 1
        %s1013 = scalar_select %p1012, %s44, 1
        %s1014 = scalar_lea.vmem %s3, %s1013
        %p1015 = scmp.lt.s32.totalorder %s44, 1
        %s1016 = scalar_select %p1015, %s44, 1
        %s1017 = scalar_lea.vmem %s4, %s1016
        %p1018 = scmp.lt.s32.totalorder %s44, 1
        %s1019 = scalar_select %p1018, %s44, 1
        %s1020 = smul.addr %s1019, 8
        %s1021 = smul.addr %s1020, 8
        %s1022 = scalar_lea.vmem %s13, %s1021
        %p1023 = scmp.lt.s32.totalorder %s44, 1
        %s1024 = scalar_select %p1023, %s44, 1
        %s1025 = smul.addr %s1024, 2
        %s1026 = scalar_lea.vmem %s14, %s1025
        %p1027 = scmp.lt.s32.totalorder %s44, 1
        %s1028 = scalar_select %p1027, %s44, 1
        %s1029 = scalar_lea.vmem %s16, %s1028
        %p1030 = scmp.lt.s32.totalorder %s44, 1
        %s1031 = scalar_select %p1030, %s44, 1
        %s1032 = scalar_lea.vmem %s18, %s1031
        %p1033 = scmp.lt.s32.totalorder %s44, 1
        %s1034 = scalar_select %p1033, %s44, 1
        %s1035 = scalar_lea.vmem %s20, %s1034
        %p1036 = scmp.lt.s32.totalorder %s44, 1
        %s1037 = scalar_select %p1036, %s44, 1
        %s1038 = scalar_lea.vmem %s22, %s1037
        %v1040 = vld [vmem:[%s1001] sm:$0xff]
        %v1041 = vld [vmem:[%s1001 + $0x8] sm:$0xf]
        %v1042 = vld [vmem:[%s1006] sm:$0xff]
        %v1043 = vld [vmem:[%s1006 + $0x8] sm:$0xff]
        %v1044 = vld [vmem:[%s1006 + $0x10] sm:$0xff]
        %v1045 = vld [vmem:[%s1006 + $0x18] sm:$0xff]
        %v1046 = vld [vmem:[%s1011] sm:$0xff]
        %v1047 = vld [vmem:[%s1011 + $0x8] sm:$0xff]
        %v1048 = vld [vmem:[%s1011 + $0x10] sm:$0xff]
        %v1049 = vld [vmem:[%s1011 + $0x18] sm:$0xff]
        %v1050 = vld [vmem:[%s1014] sm:$0x1]
        %v1051 = vld [vmem:[%s1017] sm:$0x1]
        %v1052 = vmul.f32 %v1040, 3.5527137e-15
        %v1053 = vmul.f32 %v1041, 3.5527137e-15
        %v1054 = vmax.f32 %v1052, 0.0
        %v1055 = vmax.f32 %v1053, 0.0
        %v1056 = vmin.f32 %v1054, 1.0
        %v1057 = vmin.f32 %v1055, 1.0
        %v1058 = vld [vmem:[%s5] sm:$0x1]
        %1060 = vset.pattern.permute.xlu0 0
        %1061 = vperm.xlu0 %1060, %v1056
        %v1062 = vpop.permute.xlu0 %1061
        %1065 = vset.pattern.permute.xlu0 0
        %1066 = vperm.xlu0 %1065, %v1057
        %v1067 = vpop.permute.xlu0 %1066
        %v1070 = vlaneseq
        %v1071 = vshrl.u32 %v1070, 7
        %v1072 = vsub.s32 0, %v1071
        %v1073 = vrot.slane %v1058, %v1072
        %v1075 = vmul.f32 %v1062, %v1073
        %v1076 = vmul.f32 %v1067, %v1073
        %v1077 = vld [vmem:[%s6] sm:$0x1]
        %v1079 = vlaneseq
        %v1080 = vshrl.u32 %v1079, 7
        %v1081 = vsub.s32 0, %v1080
        %v1082 = vrot.slane %v1077, %v1081
        %v1084 = vadd.f32 %v1075, %v1082
        %v1085 = vadd.f32 %v1076, %v1082
        %v1086 = vmax.f32 %v1084, 0.0
        %v1087 = vmax.f32 %v1085, 0.0
        %v1088 = vpack.c.bf16 %v1087, %v1086
        %v1089 = vld [vmem:[%s7] sm:$0xff]
        %v1090 = vld [vmem:[%s7 + $0x8] sm:$0xff]
        %v1091 = vld [vmem:[%s7 + $0x10] sm:$0xff]
        %v1092 = vld [vmem:[%s7 + $0x18] sm:$0xff]
        %v1093 = vpack.c.bf16 %v1090, %v1089
        %v1094 = vpack.c.bf16 %v1092, %v1091
        %v1095 = vld [vmem:[%s8] sm:$0x1]
        %v1097 = vlaneseq
        %v1098 = vshrl.u32 %v1097, 7
        %v1099 = vsub.s32 0, %v1098
        %v1100 = vrot.slane %v1095, %v1099
        %vm1102 = vcmask 261120
        %v1104 = vsel %vm1102, %v1088, 0
        %1106 = vmatprep.subr.bf16.mxu0 0
        %1107 = vmatpush1.bf16.msra.mxu0 0
        %1108 = vmatprep.subr.bf16.mxu0 0
        %1109 = vmatpush1.bf16.msra.mxu0 0
        %1110 = vmatprep.subr.bf16.mxu0 0
        %1111 = vmatpush1.bf16.msra.mxu0 0
        %1112 = vmatprep.subr.bf16.mxu0 0
        %1113 = vmatpush1.bf16.msra.mxu0 0
        %1114 = vmatprep.subr.bf16.mxu0 0
        %1115 = vmatpush1.bf16.msra.mxu0 0
        %1116 = vmatprep.subr.bf16.mxu0 0
        %1117 = vmatpush1.bf16.msra.mxu0 0
        %1118 = vmatprep.subr.bf16.mxu0 0
        %1119 = vmatpush1.bf16.msra.mxu0 %v1094
        %1120 = vmatprep.subr.bf16.mxu0 0
        %1121 = vmatpush1.bf16.msra.mxu0 %v1093
        %1122 = vmatprep.subr.bf16.mxu0 0
        %1123 = vmatpush2.bf16.msra.mxu0 0
        %1124 = vmatprep.subr.bf16.mxu0 0
        %1125 = vmatpush2.bf16.msra.mxu0 0
        %1126 = vmatprep.subr.bf16.mxu0 0
        %1127 = vmatpush2.bf16.msra.mxu0 0
        %1128 = vmatprep.subr.bf16.mxu0 0
        %1129 = vmatpush2.bf16.msra.mxu0 0
        %1130 = vmatprep.subr.bf16.mxu0 0
        %1131 = vmatpush2.bf16.msra.mxu0 0
        %1132 = vmatprep.subr.bf16.mxu0 0
        %1133 = vmatpush2.bf16.msra.mxu0 0
        %1134 = vmatprep.subr.bf16.mxu0 0
        %1135 = vmatpush2.bf16.msra.mxu0 0
        %1136 = vmatprep.subr.bf16.mxu0 0
        %1137 = vmatpush2.bf16.msra.mxu0 0
        %1138 = vmatprep.mubr.bf16.mxu0 0
        %1139 = vmatmul.mubr.bf16.gmra.mxu0 %v1104
        %v1140 = vpop.f32.mrf.mxu0
        %v1141 = vadd.f32 %v1100, %v1140
        %v1142 = vpop.f32.mrf.mxu0
        %v1143 = vpop.f32.mrf.mxu0
        %v1144 = vadd.f32 %v1100, %v1143
        %v1145 = vpop.f32.mrf.mxu0
        %1146 = vdwg.mxu0
        %v1147 = vld [vmem:[%s9] sm:$0x1]
        %1149 = vset.pattern.permute.xlu0 0
        %1150 = vperm.xlu0 %1149, %v1042
        %v1151 = vpop.permute.xlu0 %1150
        %1154 = vset.pattern.permute.xlu0 0
        %1155 = vperm.xlu0 %1154, %v1043
        %v1156 = vpop.permute.xlu0 %1155
        %1159 = vset.pattern.permute.xlu0 0
        %1160 = vperm.xlu0 %1159, %v1044
        %v1161 = vpop.permute.xlu0 %1160
        %1164 = vset.pattern.permute.xlu0 0
        %1165 = vperm.xlu0 %1164, %v1045
        %v1166 = vpop.permute.xlu0 %1165
        %v1169 = vlaneseq
        %v1170 = vshrl.u32 %v1169, 7
        %v1171 = vsub.s32 0, %v1170
        %v1172 = vrot.slane %v1147, %v1171
        %v1174 = vmul.f32 %v1151, %v1172
        %v1175 = vmul.f32 %v1156, %v1172
        %v1176 = vmul.f32 %v1161, %v1172
        %v1177 = vmul.f32 %v1166, %v1172
        %v1178 = vld [vmem:[%s10] sm:$0x1]
        %v1180 = vlaneseq
        %v1181 = vshrl.u32 %v1180, 7
        %v1182 = vsub.s32 0, %v1181
        %v1183 = vrot.slane %v1178, %v1182
        %v1185 = vadd.f32 %v1174, %v1183
        %v1186 = vadd.f32 %v1175, %v1183
        %v1187 = vadd.f32 %v1176, %v1183
        %v1188 = vadd.f32 %v1177, %v1183
        %v1189 = vmax.f32 %v1185, 0.0
        %v1190 = vmax.f32 %v1186, 0.0
        %v1191 = vmax.f32 %v1187, 0.0
        %v1192 = vmax.f32 %v1188, 0.0
        %v1193 = vpack.c.bf16 %v1190, %v1189
        %v1194 = vpack.c.bf16 %v1192, %v1191
        %v1195 = vld [vmem:[#allocation2] sm:$0xff]
        %v1196 = vld [vmem:[#allocation2 + $0x8] sm:$0xff]
        %v1197 = vld [vmem:[#allocation2 + $0x10] sm:$0xff]
        %v1198 = vld [vmem:[#allocation2 + $0x18] sm:$0xff]
        %v1199 = vpack.c.bf16 %v1196, %v1195
        %v1200 = vpack.c.bf16 %v1198, %v1197
        %v1201 = vld [vmem:[%s12] sm:$0x1]
        %v1203 = vlaneseq
        %v1204 = vshrl.u32 %v1203, 7
        %v1205 = vsub.s32 0, %v1204
        %v1206 = vrot.slane %v1201, %v1205
        %v1209 = vsel %vm1102, %v1193, 0
        %v1212 = vsel %vm1102, %v1194, 0
        %1214 = vmatprep.subr.bf16.mxu0 0
        %1215 = vmatpush1.bf16.msra.mxu0 0
        %1216 = vmatprep.subr.bf16.mxu0 0
        %1217 = vmatpush1.bf16.msra.mxu0 0
        %1218 = vmatprep.subr.bf16.mxu0 0
        %1219 = vmatpush1.bf16.msra.mxu0 0
        %1220 = vmatprep.subr.bf16.mxu0 0
        %1221 = vmatpush1.bf16.msra.mxu0 0
        %1222 = vmatprep.subr.bf16.mxu0 0
        %1223 = vmatpush1.bf16.msra.mxu0 0
        %1224 = vmatprep.subr.bf16.mxu0 0
        %1225 = vmatpush1.bf16.msra.mxu0 0
        %1226 = vmatprep.subr.bf16.mxu0 0
        %1227 = vmatpush1.bf16.msra.mxu0 %v1200
        %1228 = vmatprep.subr.bf16.mxu0 0
        %1229 = vmatpush1.bf16.msra.mxu0 %v1199
        %1230 = vmatprep.subr.bf16.mxu0 0
        %1231 = vmatpush2.bf16.msra.mxu0 0
        %1232 = vmatprep.subr.bf16.mxu0 0
        %1233 = vmatpush2.bf16.msra.mxu0 0
        %1234 = vmatprep.subr.bf16.mxu0 0
        %1235 = vmatpush2.bf16.msra.mxu0 0
        %1236 = vmatprep.subr.bf16.mxu0 0
        %1237 = vmatpush2.bf16.msra.mxu0 0
        %1238 = vmatprep.subr.bf16.mxu0 0
        %1239 = vmatpush2.bf16.msra.mxu0 0
        %1240 = vmatprep.subr.bf16.mxu0 0
        %1241 = vmatpush2.bf16.msra.mxu0 0
        %1242 = vmatprep.subr.bf16.mxu0 0
        %1243 = vmatpush2.bf16.msra.mxu0 0
        %1244 = vmatprep.subr.bf16.mxu0 0
        %1245 = vmatpush2.bf16.msra.mxu0 0
        %1246 = vmatprep.mubr.bf16.mxu0 0
        %1247 = vmatmul.mubr.bf16.gmra.mxu0 %v1209
        %v1248 = vpop.f32.mrf.mxu0
        %v1249 = vadd.f32 %v1206, %v1248
        %v1250 = vpop.f32.mrf.mxu0
        %v1251 = vpop.f32.mrf.mxu0
        %v1252 = vadd.f32 %v1206, %v1251
        %v1253 = vpop.f32.mrf.mxu0
        %1254 = vmatprep.mubr.bf16.mxu0 0
        %1255 = vmatmul.mubr.bf16.gmra.mxu0 %v1212
        %v1256 = vpop.f32.mrf.mxu0
        %v1257 = vadd.f32 %v1206, %v1256
        %v1258 = vpop.f32.mrf.mxu0
        %v1259 = vpop.f32.mrf.mxu0
        %v1260 = vadd.f32 %v1206, %v1259
        %v1261 = vpop.f32.mrf.mxu0
        %1262 = vdwg.mxu0
        %v1263 = vpack.c.bf16 %v1252, %v1249
        %v1264 = vpack.c.bf16 %v1260, %v1257
        %v1265 = vld [vmem:[%s1022] sm:$0xff]
        %v1266 = vld [vmem:[%s1022 + $0x8] sm:$0xff]
        %v1267 = vld [vmem:[%s1022 + $0x10] sm:$0xff]
        %v1268 = vld [vmem:[%s1022 + $0x18] sm:$0xff]
        %v1269 = vld [vmem:[%s1022 + $0x20] sm:$0xff]
        %v1270 = vld [vmem:[%s1022 + $0x28] sm:$0xff]
        %v1271 = vld [vmem:[%s1022 + $0x30] sm:$0xff]
        %v1272 = vld [vmem:[%s1022 + $0x38] sm:$0xff]
        %v1273 = vpack.c.bf16 %v1267, %v1265
        %v1274 = vpack.c.bf16 %v1268, %v1266
        %v1275 = vpack.c.bf16 %v1271, %v1269
        %v1276 = vpack.c.bf16 %v1272, %v1270
        %v1277 = vld [vmem:[%s1026] sm:$0x3]
        %v1279 = vlaneseq
        %v1280 = vshrl.u32 %v1279, 7
        %v1281 = vsub.s32 0, %v1280
        %v1282 = vrot.slane %v1277, %v1281
        %v1283 = vlaneseq
        %v1284 = vshrl.u32 %v1283, 7
        %v1285 = vsub.s32 1, %v1284
        %v1286 = vrot.slane %v1277, %v1285
        %v1290 = vsel %vm1102, %v1263, 0
        %v1293 = vsel %vm1102, %v1264, 0
        %1295 = vmatprep.subr.bf16.mxu0 0
        %1296 = vmatpush1.bf16.msra.mxu0 0
        %1297 = vmatprep.subr.bf16.mxu0 0
        %1298 = vmatpush1.bf16.msra.mxu0 0
        %1299 = vmatprep.subr.bf16.mxu0 0
        %1300 = vmatpush1.bf16.msra.mxu0 0
        %1301 = vmatprep.subr.bf16.mxu0 0
        %1302 = vmatpush1.bf16.msra.mxu0 0
        %1303 = vmatprep.subr.bf16.mxu0 0
        %1304 = vmatpush1.bf16.msra.mxu0 0
        %1305 = vmatprep.subr.bf16.mxu0 0
        %1306 = vmatpush1.bf16.msra.mxu0 0
        %1307 = vmatprep.subr.bf16.mxu0 %v1276
        %1308 = vmatpush1.bf16.msra.mxu0 %v1275
        %1309 = vmatprep.subr.bf16.mxu0 %v1274
        %1310 = vmatpush1.bf16.msra.mxu0 %v1273
        %1311 = vmatprep.subr.bf16.mxu0 0
        %1312 = vmatpush2.bf16.msra.mxu0 0
        %1313 = vmatprep.subr.bf16.mxu0 0
        %1314 = vmatpush2.bf16.msra.mxu0 0
        %1315 = vmatprep.subr.bf16.mxu0 0
        %1316 = vmatpush2.bf16.msra.mxu0 0
        %1317 = vmatprep.subr.bf16.mxu0 0
        %1318 = vmatpush2.bf16.msra.mxu0 0
        %1319 = vmatprep.subr.bf16.mxu0 0
        %1320 = vmatpush2.bf16.msra.mxu0 0
        %1321 = vmatprep.subr.bf16.mxu0 0
        %1322 = vmatpush2.bf16.msra.mxu0 0
        %1323 = vmatprep.subr.bf16.mxu0 0
        %1324 = vmatpush2.bf16.msra.mxu0 0
        %1325 = vmatprep.subr.bf16.mxu0 0
        %1326 = vmatpush2.bf16.msra.mxu0 0
        %1327 = vmatprep.mubr.bf16.mxu0 0
        %1328 = vmatmul.mubr.bf16.gmra.mxu0 %v1290
        %v1329 = vpop.f32.mrf.mxu0
        %v1330 = vadd.f32 %v1282, %v1329
        %v1331 = vpop.f32.mrf.mxu0
        %v1332 = vadd.f32 %v1286, %v1331
        %v1333 = vpop.f32.mrf.mxu0
        %v1334 = vadd.f32 %v1282, %v1333
        %v1335 = vpop.f32.mrf.mxu0
        %v1336 = vadd.f32 %v1286, %v1335
        %1337 = vmatprep.mubr.bf16.mxu0 0
        %1338 = vmatmul.mubr.bf16.gmra.mxu0 %v1293
        %v1339 = vpop.f32.mrf.mxu0
        %v1340 = vadd.f32 %v1282, %v1339
        %v1341 = vpop.f32.mrf.mxu0
        %v1342 = vadd.f32 %v1286, %v1341
        %v1343 = vpop.f32.mrf.mxu0
        %v1344 = vadd.f32 %v1282, %v1343
        %v1345 = vpop.f32.mrf.mxu0
        %v1346 = vadd.f32 %v1286, %v1345
        %1347 = vdwg.mxu0
        %v1348 = vld [vmem:[%s850] sm:$0xff]
        %v1349 = vld [vmem:[%s850 + $0x8] sm:$0xff]
        %v1350 = vld [vmem:[%s850 + $0x10] sm:$0xff]
        %v1351 = vld [vmem:[%s850 + $0x18] sm:$0xff]
        %v1352 = vld [vmem:[%s1029] sm:$0x1]
        %v1353 = vld [vmem:[%s859] sm:$0xff]
        %v1354 = vld [vmem:[%s859 + $0x8] sm:$0xff]
        %v1355 = vld [vmem:[%s859 + $0x10] sm:$0xff]
        %v1356 = vld [vmem:[%s859 + $0x18] sm:$0xff]
        %v1357 = vld [vmem:[%s859 + $0x20] sm:$0xff]
        %v1358 = vld [vmem:[%s859 + $0x28] sm:$0xff]
        %v1359 = vld [vmem:[%s859 + $0x30] sm:$0xff]
        %v1360 = vld [vmem:[%s859 + $0x38] sm:$0xff]
        %v1361 = vld [vmem:[%s1032] sm:$0x1]
        %v1362 = vpack.c.bf16 %v1144, %v1141
        %v1363 = vlaneseq
        %v1364 = vand.u32 %v1363, 127
        %1365 = vset.pattern.permute.xlu0 0
        %1366 = vperm.xlu0 %1365, %v1046
        %v1367 = vpop.permute.xlu0 %1366
        %1368 = vset.pattern.permute.xlu0 0
        %1369 = vperm.xlu0 %1368, %v1047
        %v1370 = vpop.permute.xlu0 %1369
        %vm1371 = vcmp.eq.s32.totalorder %v1367, %v1364
        %vm1372 = vcmp.eq.s32.totalorder %v1370, %v1364
        %v1373 = vsel %vm1371, 1, 0
        %v1374 = vsel %vm1372, 1, 0
        %v1375 = vcvt.s32.f32 %v1373
        %v1376 = vcvt.s32.f32 %v1374
        %v1377 = vpack.c.bf16 %v1376, %v1375
        %v1378 = vlaneseq
        %v1379 = vshrl.u32 %v1378, 7
        %v1380 = vadd.s32 %v1379, 8
        %v1381 = vlaneseq
        %v1382 = vshrl.u32 %v1381, 7
        %v1383 = vsub.s32 0, %v1382
        %v1384 = vrot.slane %v1050, %v1383
        %vm1385 = vcmp.eq.s32.totalorder %v1384, %v1379
        %vm1386 = vcmp.eq.s32.totalorder %v1384, %v1380
        %v1387 = vsel %vm1385, 1, 0
        %v1388 = vsel %vm1386, 1, 0
        %v1389 = vcvt.s32.f32 %v1387
        %v1390 = vcvt.s32.f32 %v1388
        %v1391 = vpack.c.bf16 %v1390, %v1389
        %vm1392 = vcmask 97280
        %v1394 = vsel %vm1392, %v1377, 0
        %vm1396 = vcmask 1045504
        %v1398 = vsel %vm1396, %v1362, 0
        %1400 = vmatprep.subr.bf16.mxu0 0
        %1401 = vmatpush1.bf16.msra.mxu0 0
        %1402 = vmatprep.subr.bf16.mxu0 0
        %1403 = vmatpush1.bf16.msra.mxu0 0
        %1404 = vmatprep.subr.bf16.mxu0 0
        %1405 = vmatpush1.bf16.msra.mxu0 0
        %1406 = vmatprep.subr.bf16.mxu0 0
        %1407 = vmatpush1.bf16.msra.mxu0 0
        %1408 = vmatprep.subr.bf16.mxu0 0
        %1409 = vmatpush1.bf16.msra.mxu0 0
        %1410 = vmatprep.subr.bf16.mxu0 0
        %1411 = vmatpush1.bf16.msra.mxu0 0
        %1412 = vmatprep.subr.bf16.mxu0 0
        %1413 = vmatpush1.bf16.msra.mxu0 0
        %1414 = vmatprep.subr.bf16.mxu0 0
        %1415 = vmatpush1.bf16.msra.mxu0 %v1398
        %1416 = vmatprep.subr.bf16.mxu0 0
        %1417 = vmatpush2.bf16.msra.mxu0 0
        %1418 = vmatprep.subr.bf16.mxu0 0
        %1419 = vmatpush2.bf16.msra.mxu0 0
        %1420 = vmatprep.subr.bf16.mxu0 0
        %1421 = vmatpush2.bf16.msra.mxu0 0
        %1422 = vmatprep.subr.bf16.mxu0 0
        %1423 = vmatpush2.bf16.msra.mxu0 0
        %1424 = vmatprep.subr.bf16.mxu0 0
        %1425 = vmatpush2.bf16.msra.mxu0 0
        %1426 = vmatprep.subr.bf16.mxu0 0
        %1427 = vmatpush2.bf16.msra.mxu0 0
        %1428 = vmatprep.subr.bf16.mxu0 0
        %1429 = vmatpush2.bf16.msra.mxu0 0
        %1430 = vmatprep.subr.bf16.mxu0 0
        %1431 = vmatpush2.bf16.msra.mxu0 0
        %1432 = vmatprep.mubr.bf16.mxu0 0
        %1433 = vmatmul.mubr.bf16.gmra.mxu0 %v1394
        %v1434 = vpop.f32.mrf.mxu0
        %v1435 = vadd.f32 %v1330, %v1434
        %v1436 = vpop.f32.mrf.mxu0
        %v1437 = vpop.f32.mrf.mxu0
        %v1438 = vadd.f32 %v1334, %v1437
        %v1439 = vpop.f32.mrf.mxu0
        %1440 = vdwg.mxu0
        %v1441 = vmax.f32 %v1435, 0.0
        %v1442 = vmax.f32 %v1438, 0.0
        %v1443 = vpack.c.bf16 %v1442, %v1441
        %1444 = vset.pattern.permute.xlu0 0
        %1445 = vperm.xlu0 %1444, %v1048
        %v1446 = vpop.permute.xlu0 %1445
        %1447 = vset.pattern.permute.xlu0 0
        %1448 = vperm.xlu0 %1447, %v1049
        %v1449 = vpop.permute.xlu0 %1448
        %vm1450 = vcmp.eq.s32.totalorder %v1446, %v1364
        %vm1451 = vcmp.eq.s32.totalorder %v1449, %v1364
        %v1452 = vsel %vm1450, 1, 0
        %v1453 = vsel %vm1451, 1, 0
        %v1454 = vcvt.s32.f32 %v1452
        %v1455 = vcvt.s32.f32 %v1453
        %v1456 = vpack.c.bf16 %v1455, %v1454
        %v1458 = vsel %vm1392, %v1456, 0
        %1460 = vmatprep.subr.bf16.mxu0 0
        %1461 = vmatpush1.bf16.msra.mxu0 0
        %1462 = vmatprep.subr.bf16.mxu0 0
        %1463 = vmatpush1.bf16.msra.mxu0 0
        %1464 = vmatprep.subr.bf16.mxu0 0
        %1465 = vmatpush1.bf16.msra.mxu0 0
        %1466 = vmatprep.subr.bf16.mxu0 0
        %1467 = vmatpush1.bf16.msra.mxu0 0
        %1468 = vmatprep.subr.bf16.mxu0 0
        %1469 = vmatpush1.bf16.msra.mxu0 0
        %1470 = vmatprep.subr.bf16.mxu0 0
        %1471 = vmatpush1.bf16.msra.mxu0 0
        %1472 = vmatprep.subr.bf16.mxu0 0
        %1473 = vmatpush1.bf16.msra.mxu0 0
        %1474 = vmatprep.subr.bf16.mxu0 0
        %1475 = vmatpush1.bf16.msra.mxu0 %v1398
        %1476 = vmatprep.subr.bf16.mxu0 0
        %1477 = vmatpush2.bf16.msra.mxu0 0
        %1478 = vmatprep.subr.bf16.mxu0 0
        %1479 = vmatpush2.bf16.msra.mxu0 0
        %1480 = vmatprep.subr.bf16.mxu0 0
        %1481 = vmatpush2.bf16.msra.mxu0 0
        %1482 = vmatprep.subr.bf16.mxu0 0
        %1483 = vmatpush2.bf16.msra.mxu0 0
        %1484 = vmatprep.subr.bf16.mxu0 0
        %1485 = vmatpush2.bf16.msra.mxu0 0
        %1486 = vmatprep.subr.bf16.mxu0 0
        %1487 = vmatpush2.bf16.msra.mxu0 0
        %1488 = vmatprep.subr.bf16.mxu0 0
        %1489 = vmatpush2.bf16.msra.mxu0 0
        %1490 = vmatprep.subr.bf16.mxu0 0
        %1491 = vmatpush2.bf16.msra.mxu0 0
        %1492 = vmatprep.mubr.bf16.mxu0 0
        %1493 = vmatmul.mubr.bf16.gmra.mxu0 %v1458
        %v1494 = vpop.f32.mrf.mxu0
        %v1495 = vadd.f32 %v1340, %v1494
        %v1496 = vpop.f32.mrf.mxu0
        %v1497 = vpop.f32.mrf.mxu0
        %v1498 = vadd.f32 %v1344, %v1497
        %v1499 = vpop.f32.mrf.mxu0
        %1500 = vdwg.mxu0
        %v1501 = vmax.f32 %v1495, 0.0
        %v1502 = vmax.f32 %v1498, 0.0
        %v1503 = vpack.c.bf16 %v1502, %v1501
        %1505 = vrot.lane.b32.xlu0 %v1391, 112
        %v1506 = vpop.permute.xlu0 %1505
        %vm1507 = vcmask 130048
        %v1509 = vsel %vm1507, %v1506, 0
        %1511 = vmatprep.subr.bf16.mxu0 0
        %1512 = vmatpush1.bf16.msra.mxu0 0
        %1513 = vmatprep.subr.bf16.mxu0 0
        %1514 = vmatpush1.bf16.msra.mxu0 0
        %1515 = vmatprep.subr.bf16.mxu0 0
        %1516 = vmatpush1.bf16.msra.mxu0 0
        %1517 = vmatprep.subr.bf16.mxu0 0
        %1518 = vmatpush1.bf16.msra.mxu0 0
        %1519 = vmatprep.subr.bf16.mxu0 0
        %1520 = vmatpush1.bf16.msra.mxu0 0
        %1521 = vmatprep.subr.bf16.mxu0 0
        %1522 = vmatpush1.bf16.msra.mxu0 0
        %1523 = vmatprep.subr.bf16.mxu0 0
        %1524 = vmatpush1.bf16.msra.mxu0 0
        %1525 = vmatprep.subr.bf16.mxu0 0
        %1526 = vmatpush1.bf16.msra.mxu0 %v1503
        %1527 = vmatprep.subr.bf16.mxu0 0
        %1528 = vmatpush2.bf16.msra.mxu0 0
        %1529 = vmatprep.subr.bf16.mxu0 0
        %1530 = vmatpush2.bf16.msra.mxu0 0
        %1531 = vmatprep.subr.bf16.mxu0 0
        %1532 = vmatpush2.bf16.msra.mxu0 0
        %1533 = vmatprep.subr.bf16.mxu0 0
        %1534 = vmatpush2.bf16.msra.mxu0 0
        %1535 = vmatprep.subr.bf16.mxu0 0
        %1536 = vmatpush2.bf16.msra.mxu0 0
        %1537 = vmatprep.subr.bf16.mxu0 0
        %1538 = vmatpush2.bf16.msra.mxu0 0
        %1539 = vmatprep.subr.bf16.mxu0 0
        %1540 = vmatpush2.bf16.msra.mxu0 0
        %1541 = vmatprep.subr.bf16.mxu0 0
        %1542 = vmatpush2.bf16.msra.mxu0 0
        %1543 = vmatprep.mubr.bf16.mxu0 0
        %1544 = vmatmul.mubr.bf16.gmra.mxu0 %v1509
        %v1545 = vpop.f32.mrf.mxu0
        %v1546 = vadd.f32 0.0, %v1545
        %v1547 = vpop.f32.mrf.mxu0
        %v1548 = vpop.f32.mrf.mxu0
        %v1549 = vadd.f32 0.0, %v1548
        %v1550 = vpop.f32.mrf.mxu0
        %1551 = vdwg.mxu0
        %v1553 = vsel %vm1507, %v1391, 0
        %1555 = vmatprep.subr.bf16.mxu0 0
        %1556 = vmatpush1.bf16.msra.mxu0 0
        %1557 = vmatprep.subr.bf16.mxu0 0
        %1558 = vmatpush1.bf16.msra.mxu0 0
        %1559 = vmatprep.subr.bf16.mxu0 0
        %1560 = vmatpush1.bf16.msra.mxu0 0
        %1561 = vmatprep.subr.bf16.mxu0 0
        %1562 = vmatpush1.bf16.msra.mxu0 0
        %1563 = vmatprep.subr.bf16.mxu0 0
        %1564 = vmatpush1.bf16.msra.mxu0 0
        %1565 = vmatprep.subr.bf16.mxu0 0
        %1566 = vmatpush1.bf16.msra.mxu0 0
        %1567 = vmatprep.subr.bf16.mxu0 0
        %1568 = vmatpush1.bf16.msra.mxu0 0
        %1569 = vmatprep.subr.bf16.mxu0 0
        %1570 = vmatpush1.bf16.msra.mxu0 %v1443
        %1571 = vmatprep.subr.bf16.mxu0 0
        %1572 = vmatpush2.bf16.msra.mxu0 0
        %1573 = vmatprep.subr.bf16.mxu0 0
        %1574 = vmatpush2.bf16.msra.mxu0 0
        %1575 = vmatprep.subr.bf16.mxu0 0
        %1576 = vmatpush2.bf16.msra.mxu0 0
        %1577 = vmatprep.subr.bf16.mxu0 0
        %1578 = vmatpush2.bf16.msra.mxu0 0
        %1579 = vmatprep.subr.bf16.mxu0 0
        %1580 = vmatpush2.bf16.msra.mxu0 0
        %1581 = vmatprep.subr.bf16.mxu0 0
        %1582 = vmatpush2.bf16.msra.mxu0 0
        %1583 = vmatprep.subr.bf16.mxu0 0
        %1584 = vmatpush2.bf16.msra.mxu0 0
        %1585 = vmatprep.subr.bf16.mxu0 0
        %1586 = vmatpush2.bf16.msra.mxu0 0
        %1587 = vmatprep.mubr.bf16.mxu0 0
        %1588 = vmatmul.mubr.bf16.gmra.mxu0 %v1553
        %v1589 = vpop.f32.mrf.mxu0
        %v1590 = vadd.f32 %v1546, %v1589
        %v1591 = vpop.f32.mrf.mxu0
        %v1592 = vpop.f32.mrf.mxu0
        %v1593 = vadd.f32 %v1549, %v1592
        %v1594 = vpop.f32.mrf.mxu0
        %1595 = vdwg.mxu0
        %v1596 = vadd.f32 %v1590, %v1141
        %v1597 = vadd.f32 %v1593, %v1144
        %v1598 = vpack.c.bf16 %v1597, %v1596
        %v1599 = vpack.c.bf16 %v1349, %v1348
        %v1600 = vpack.c.bf16 %v1351, %v1350
        %v1602 = vlaneseq
        %v1603 = vshrl.u32 %v1602, 7
        %v1604 = vsub.s32 0, %v1603
        %v1605 = vrot.slane %v1352, %v1604
        %v1608 = vsel %vm1102, %v1598, 0
        %1610 = vmatprep.subr.bf16.mxu0 0
        %1611 = vmatpush1.bf16.msra.mxu0 0
        %1612 = vmatprep.subr.bf16.mxu0 0
        %1613 = vmatpush1.bf16.msra.mxu0 0
        %1614 = vmatprep.subr.bf16.mxu0 0
        %1615 = vmatpush1.bf16.msra.mxu0 0
        %1616 = vmatprep.subr.bf16.mxu0 0
        %1617 = vmatpush1.bf16.msra.mxu0 0
        %1618 = vmatprep.subr.bf16.mxu0 0
        %1619 = vmatpush1.bf16.msra.mxu0 0
        %1620 = vmatprep.subr.bf16.mxu0 0
        %1621 = vmatpush1.bf16.msra.mxu0 0
        %1622 = vmatprep.subr.bf16.mxu0 0
        %1623 = vmatpush1.bf16.msra.mxu0 %v1600
        %1624 = vmatprep.subr.bf16.mxu0 0
        %1625 = vmatpush1.bf16.msra.mxu0 %v1599
        %1626 = vmatprep.subr.bf16.mxu0 0
        %1627 = vmatpush2.bf16.msra.mxu0 0
        %1628 = vmatprep.subr.bf16.mxu0 0
        %1629 = vmatpush2.bf16.msra.mxu0 0
        %1630 = vmatprep.subr.bf16.mxu0 0
        %1631 = vmatpush2.bf16.msra.mxu0 0
        %1632 = vmatprep.subr.bf16.mxu0 0
        %1633 = vmatpush2.bf16.msra.mxu0 0
        %1634 = vmatprep.subr.bf16.mxu0 0
        %1635 = vmatpush2.bf16.msra.mxu0 0
        %1636 = vmatprep.subr.bf16.mxu0 0
        %1637 = vmatpush2.bf16.msra.mxu0 0
        %1638 = vmatprep.subr.bf16.mxu0 0
        %1639 = vmatpush2.bf16.msra.mxu0 0
        %1640 = vmatprep.subr.bf16.mxu0 0
        %1641 = vmatpush2.bf16.msra.mxu0 0
        %1642 = vmatprep.mubr.bf16.mxu0 0
        %1643 = vmatmul.mubr.bf16.gmra.mxu0 %v1608
        %v1644 = vpop.f32.mrf.mxu0
        %v1645 = vadd.f32 %v1605, %v1644
        %v1646 = vpop.f32.mrf.mxu0
        %v1647 = vpop.f32.mrf.mxu0
        %v1648 = vadd.f32 %v1605, %v1647
        %v1649 = vpop.f32.mrf.mxu0
        %1650 = vdwg.mxu0
        %v1651 = vmax.f32 %v1645, 0.0
        %v1652 = vmax.f32 %v1648, 0.0
        %v1653 = vpack.c.bf16 %v1652, %v1651
        %v1654 = vpack.c.bf16 %v1354, %v1353
        %v1655 = vpack.c.bf16 %v1356, %v1355
        %v1656 = vpack.c.bf16 %v1358, %v1357
        %v1657 = vpack.c.bf16 %v1360, %v1359
        %v1659 = vlaneseq
        %v1660 = vshrl.u32 %v1659, 7
        %v1661 = vsub.s32 0, %v1660
        %v1662 = vrot.slane %v1361, %v1661
        %vm1664 = vcmask 523264
        %v1666 = vsel %vm1664, %v1653, 0
        %1668 = vmatprep.subr.bf16.mxu0 0
        %1669 = vmatpush1.bf16.msra.mxu0 0
        %1670 = vmatprep.subr.bf16.mxu0 0
        %1671 = vmatpush1.bf16.msra.mxu0 0
        %1672 = vmatprep.subr.bf16.mxu0 0
        %1673 = vmatpush1.bf16.msra.mxu0 0
        %1674 = vmatprep.subr.bf16.mxu0 0
        %1675 = vmatpush1.bf16.msra.mxu0 0
        %1676 = vmatprep.subr.bf16.mxu0 0
        %1677 = vmatpush1.bf16.msra.mxu0 %v1657
        %1678 = vmatprep.subr.bf16.mxu0 0
        %1679 = vmatpush1.bf16.msra.mxu0 %v1656
        %1680 = vmatprep.subr.bf16.mxu0 0
        %1681 = vmatpush1.bf16.msra.mxu0 %v1655
        %1682 = vmatprep.subr.bf16.mxu0 0
        %1683 = vmatpush1.bf16.msra.mxu0 %v1654
        %1684 = vmatprep.subr.bf16.mxu0 0
        %1685 = vmatpush2.bf16.msra.mxu0 0
        %1686 = vmatprep.subr.bf16.mxu0 0
        %1687 = vmatpush2.bf16.msra.mxu0 0
        %1688 = vmatprep.subr.bf16.mxu0 0
        %1689 = vmatpush2.bf16.msra.mxu0 0
        %1690 = vmatprep.subr.bf16.mxu0 0
        %1691 = vmatpush2.bf16.msra.mxu0 0
        %1692 = vmatprep.subr.bf16.mxu0 0
        %1693 = vmatpush2.bf16.msra.mxu0 0
        %1694 = vmatprep.subr.bf16.mxu0 0
        %1695 = vmatpush2.bf16.msra.mxu0 0
        %1696 = vmatprep.subr.bf16.mxu0 0
        %1697 = vmatpush2.bf16.msra.mxu0 0
        %1698 = vmatprep.subr.bf16.mxu0 0
        %1699 = vmatpush2.bf16.msra.mxu0 0
        %1700 = vmatprep.mubr.bf16.mxu0 0
        %1701 = vmatmul.mubr.bf16.gmra.mxu0 %v1666
        %v1702 = vpop.f32.mrf.mxu0
        %v1703 = vadd.f32 %v1662, %v1702
        %v1704 = vpop.f32.mrf.mxu0
        %v1705 = vpop.f32.mrf.mxu0
        %v1706 = vadd.f32 %v1662, %v1705
        %v1707 = vpop.f32.mrf.mxu0
        %1708 = vdwg.mxu0
        %v1709 = vmax.f32 %v1703, 0.0
        %v1710 = vmax.f32 %v1706, 0.0
        %v1711 = vld [vmem:[%s868] sm:$0xff]
        %v1712 = vld [vmem:[%s868 + $0x8] sm:$0xff]
        %v1713 = vld [vmem:[%s868 + $0x10] sm:$0xff]
        %v1714 = vld [vmem:[%s868 + $0x18] sm:$0xff]
        %v1715 = vld [vmem:[%s868 + $0x20] sm:$0xff]
        %v1716 = vld [vmem:[%s868 + $0x28] sm:$0xff]
        %v1717 = vld [vmem:[%s868 + $0x30] sm:$0xff]
        %v1718 = vld [vmem:[%s868 + $0x38] sm:$0xff]
        %v1719 = vld [vmem:[%s1035] sm:$0x1]
        %v1720 = vld [vmem:[%s877] sm:$0xff]
        %v1721 = vld [vmem:[%s877 + $0x8] sm:$0xff]
        %v1722 = vld [vmem:[%s877 + $0x10] sm:$0xff]
        %v1723 = vld [vmem:[%s877 + $0x18] sm:$0xff]
        %v1724 = vld [vmem:[%s877 + $0x20] sm:$0xff]
        %v1725 = vld [vmem:[%s877 + $0x28] sm:$0xff]
        %v1726 = vld [vmem:[%s877 + $0x30] sm:$0xff]
        %v1727 = vld [vmem:[%s877 + $0x38] sm:$0xff]
        %v1728 = vld [vmem:[%s1038] sm:$0x1]
        %v1729 = vpack.c.bf16 %v1710, %v1709
        %v1731 = vsel %vm1396, %v1729, 0
        %1733 = vmatprep.subr.bf16.mxu0 0
        %1734 = vmatpush1.bf16.msra.mxu0 0
        %1735 = vmatprep.subr.bf16.mxu0 0
        %1736 = vmatpush1.bf16.msra.mxu0 0
        %1737 = vmatprep.subr.bf16.mxu0 0
        %1738 = vmatpush1.bf16.msra.mxu0 0
        %1739 = vmatprep.subr.bf16.mxu0 0
        %1740 = vmatpush1.bf16.msra.mxu0 0
        %1741 = vmatprep.subr.bf16.mxu0 0
        %1742 = vmatpush1.bf16.msra.mxu0 0
        %1743 = vmatprep.subr.bf16.mxu0 0
        %1744 = vmatpush1.bf16.msra.mxu0 0
        %1745 = vmatprep.subr.bf16.mxu0 0
        %1746 = vmatpush1.bf16.msra.mxu0 0
        %1747 = vmatprep.subr.bf16.mxu0 0
        %1748 = vmatpush1.bf16.msra.mxu0 %v1731
        %1749 = vmatprep.subr.bf16.mxu0 0
        %1750 = vmatpush2.bf16.msra.mxu0 0
        %1751 = vmatprep.subr.bf16.mxu0 0
        %1752 = vmatpush2.bf16.msra.mxu0 0
        %1753 = vmatprep.subr.bf16.mxu0 0
        %1754 = vmatpush2.bf16.msra.mxu0 0
        %1755 = vmatprep.subr.bf16.mxu0 0
        %1756 = vmatpush2.bf16.msra.mxu0 0
        %1757 = vmatprep.subr.bf16.mxu0 0
        %1758 = vmatpush2.bf16.msra.mxu0 0
        %1759 = vmatprep.subr.bf16.mxu0 0
        %1760 = vmatpush2.bf16.msra.mxu0 0
        %1761 = vmatprep.subr.bf16.mxu0 0
        %1762 = vmatpush2.bf16.msra.mxu0 0
        %1763 = vmatprep.subr.bf16.mxu0 0
        %1764 = vmatpush2.bf16.msra.mxu0 0
        %1765 = vmatprep.mubr.bf16.mxu0 0
        %1766 = vmatmul.mubr.bf16.gmra.mxu0 %v1394
        %v1767 = vpop.f32.mrf.mxu0
        %v1768 = vadd.f32 %v1332, %v1767
        %v1769 = vpop.f32.mrf.mxu0
        %v1770 = vpop.f32.mrf.mxu0
        %v1771 = vadd.f32 %v1336, %v1770
        %v1772 = vpop.f32.mrf.mxu0
        %1773 = vdwg.mxu0
        %v1774 = vmax.f32 %v1768, 0.0
        %v1775 = vmax.f32 %v1771, 0.0
        %v1776 = vpack.c.bf16 %v1775, %v1774
        %1777 = vmatprep.subr.bf16.mxu0 0
        %1778 = vmatpush1.bf16.msra.mxu0 0
        %1779 = vmatprep.subr.bf16.mxu0 0
        %1780 = vmatpush1.bf16.msra.mxu0 0
        %1781 = vmatprep.subr.bf16.mxu0 0
        %1782 = vmatpush1.bf16.msra.mxu0 0
        %1783 = vmatprep.subr.bf16.mxu0 0
        %1784 = vmatpush1.bf16.msra.mxu0 0
        %1785 = vmatprep.subr.bf16.mxu0 0
        %1786 = vmatpush1.bf16.msra.mxu0 0
        %1787 = vmatprep.subr.bf16.mxu0 0
        %1788 = vmatpush1.bf16.msra.mxu0 0
        %1789 = vmatprep.subr.bf16.mxu0 0
        %1790 = vmatpush1.bf16.msra.mxu0 0
        %1791 = vmatprep.subr.bf16.mxu0 0
        %1792 = vmatpush1.bf16.msra.mxu0 %v1731
        %1793 = vmatprep.subr.bf16.mxu0 0
        %1794 = vmatpush2.bf16.msra.mxu0 0
        %1795 = vmatprep.subr.bf16.mxu0 0
        %1796 = vmatpush2.bf16.msra.mxu0 0
        %1797 = vmatprep.subr.bf16.mxu0 0
        %1798 = vmatpush2.bf16.msra.mxu0 0
        %1799 = vmatprep.subr.bf16.mxu0 0
        %1800 = vmatpush2.bf16.msra.mxu0 0
        %1801 = vmatprep.subr.bf16.mxu0 0
        %1802 = vmatpush2.bf16.msra.mxu0 0
        %1803 = vmatprep.subr.bf16.mxu0 0
        %1804 = vmatpush2.bf16.msra.mxu0 0
        %1805 = vmatprep.subr.bf16.mxu0 0
        %1806 = vmatpush2.bf16.msra.mxu0 0
        %1807 = vmatprep.subr.bf16.mxu0 0
        %1808 = vmatpush2.bf16.msra.mxu0 0
        %1809 = vmatprep.mubr.bf16.mxu0 0
        %1810 = vmatmul.mubr.bf16.gmra.mxu0 %v1458
        %v1811 = vpop.f32.mrf.mxu0
        %v1812 = vadd.f32 %v1342, %v1811
        %v1813 = vpop.f32.mrf.mxu0
        %v1814 = vpop.f32.mrf.mxu0
        %v1815 = vadd.f32 %v1346, %v1814
        %v1816 = vpop.f32.mrf.mxu0
        %1817 = vdwg.mxu0
        %v1818 = vmax.f32 %v1812, 0.0
        %v1819 = vmax.f32 %v1815, 0.0
        %v1820 = vpack.c.bf16 %v1819, %v1818
        %1821 = vmatprep.subr.bf16.mxu0 0
        %1822 = vmatpush1.bf16.msra.mxu0 0
        %1823 = vmatprep.subr.bf16.mxu0 0
        %1824 = vmatpush1.bf16.msra.mxu0 0
        %1825 = vmatprep.subr.bf16.mxu0 0
        %1826 = vmatpush1.bf16.msra.mxu0 0
        %1827 = vmatprep.subr.bf16.mxu0 0
        %1828 = vmatpush1.bf16.msra.mxu0 0
        %1829 = vmatprep.subr.bf16.mxu0 0
        %1830 = vmatpush1.bf16.msra.mxu0 0
        %1831 = vmatprep.subr.bf16.mxu0 0
        %1832 = vmatpush1.bf16.msra.mxu0 0
        %1833 = vmatprep.subr.bf16.mxu0 0
        %1834 = vmatpush1.bf16.msra.mxu0 0
        %1835 = vmatprep.subr.bf16.mxu0 0
        %1836 = vmatpush1.bf16.msra.mxu0 %v1820
        %1837 = vmatprep.subr.bf16.mxu0 0
        %1838 = vmatpush2.bf16.msra.mxu0 0
        %1839 = vmatprep.subr.bf16.mxu0 0
        %1840 = vmatpush2.bf16.msra.mxu0 0
        %1841 = vmatprep.subr.bf16.mxu0 0
        %1842 = vmatpush2.bf16.msra.mxu0 0
        %1843 = vmatprep.subr.bf16.mxu0 0
        %1844 = vmatpush2.bf16.msra.mxu0 0
        %1845 = vmatprep.subr.bf16.mxu0 0
        %1846 = vmatpush2.bf16.msra.mxu0 0
        %1847 = vmatprep.subr.bf16.mxu0 0
        %1848 = vmatpush2.bf16.msra.mxu0 0
        %1849 = vmatprep.subr.bf16.mxu0 0
        %1850 = vmatpush2.bf16.msra.mxu0 0
        %1851 = vmatprep.subr.bf16.mxu0 0
        %1852 = vmatpush2.bf16.msra.mxu0 0
        %1853 = vmatprep.mubr.bf16.mxu0 0
        %1854 = vmatmul.mubr.bf16.gmra.mxu0 %v1509
        %v1855 = vpop.f32.mrf.mxu0
        %v1856 = vadd.f32 0.0, %v1855
        %v1857 = vpop.f32.mrf.mxu0
        %v1858 = vpop.f32.mrf.mxu0
        %v1859 = vadd.f32 0.0, %v1858
        %v1860 = vpop.f32.mrf.mxu0
        %1861 = vdwg.mxu0
        %1862 = vmatprep.subr.bf16.mxu0 0
        %1863 = vmatpush1.bf16.msra.mxu0 0
        %1864 = vmatprep.subr.bf16.mxu0 0
        %1865 = vmatpush1.bf16.msra.mxu0 0
        %1866 = vmatprep.subr.bf16.mxu0 0
        %1867 = vmatpush1.bf16.msra.mxu0 0
        %1868 = vmatprep.subr.bf16.mxu0 0
        %1869 = vmatpush1.bf16.msra.mxu0 0
        %1870 = vmatprep.subr.bf16.mxu0 0
        %1871 = vmatpush1.bf16.msra.mxu0 0
        %1872 = vmatprep.subr.bf16.mxu0 0
        %1873 = vmatpush1.bf16.msra.mxu0 0
        %1874 = vmatprep.subr.bf16.mxu0 0
        %1875 = vmatpush1.bf16.msra.mxu0 0
        %1876 = vmatprep.subr.bf16.mxu0 0
        %1877 = vmatpush1.bf16.msra.mxu0 %v1776
        %1878 = vmatprep.subr.bf16.mxu0 0
        %1879 = vmatpush2.bf16.msra.mxu0 0
        %1880 = vmatprep.subr.bf16.mxu0 0
        %1881 = vmatpush2.bf16.msra.mxu0 0
        %1882 = vmatprep.subr.bf16.mxu0 0
        %1883 = vmatpush2.bf16.msra.mxu0 0
        %1884 = vmatprep.subr.bf16.mxu0 0
        %1885 = vmatpush2.bf16.msra.mxu0 0
        %1886 = vmatprep.subr.bf16.mxu0 0
        %1887 = vmatpush2.bf16.msra.mxu0 0
        %1888 = vmatprep.subr.bf16.mxu0 0
        %1889 = vmatpush2.bf16.msra.mxu0 0
        %1890 = vmatprep.subr.bf16.mxu0 0
        %1891 = vmatpush2.bf16.msra.mxu0 0
        %1892 = vmatprep.subr.bf16.mxu0 0
        %1893 = vmatpush2.bf16.msra.mxu0 0
        %1894 = vmatprep.mubr.bf16.mxu0 0
        %1895 = vmatmul.mubr.bf16.gmra.mxu0 %v1553
        %v1896 = vpop.f32.mrf.mxu0
        %v1897 = vadd.f32 %v1856, %v1896
        %v1898 = vpop.f32.mrf.mxu0
        %v1899 = vpop.f32.mrf.mxu0
        %v1900 = vadd.f32 %v1859, %v1899
        %v1901 = vpop.f32.mrf.mxu0
        %1902 = vdwg.mxu0
        %v1903 = vadd.f32 %v1897, %v1709
        %v1904 = vadd.f32 %v1900, %v1710
        %v1905 = vpack.c.bf16 %v1904, %v1903
        %v1906 = vpack.c.bf16 %v1712, %v1711
        %v1907 = vpack.c.bf16 %v1714, %v1713
        %v1908 = vpack.c.bf16 %v1716, %v1715
        %v1909 = vpack.c.bf16 %v1718, %v1717
        %v1911 = vlaneseq
        %v1912 = vshrl.u32 %v1911, 7
        %v1913 = vsub.s32 0, %v1912
        %v1914 = vrot.slane %v1719, %v1913
        %v1917 = vsel %vm1664, %v1905, 0
        %1919 = vmatprep.subr.bf16.mxu0 0
        %1920 = vmatpush1.bf16.msra.mxu0 0
        %1921 = vmatprep.subr.bf16.mxu0 0
        %1922 = vmatpush1.bf16.msra.mxu0 0
        %1923 = vmatprep.subr.bf16.mxu0 0
        %1924 = vmatpush1.bf16.msra.mxu0 0
        %1925 = vmatprep.subr.bf16.mxu0 0
        %1926 = vmatpush1.bf16.msra.mxu0 0
        %1927 = vmatprep.subr.bf16.mxu0 0
        %1928 = vmatpush1.bf16.msra.mxu0 %v1909
        %1929 = vmatprep.subr.bf16.mxu0 0
        %1930 = vmatpush1.bf16.msra.mxu0 %v1908
        %1931 = vmatprep.subr.bf16.mxu0 0
        %1932 = vmatpush1.bf16.msra.mxu0 %v1907
        %1933 = vmatprep.subr.bf16.mxu0 0
        %1934 = vmatpush1.bf16.msra.mxu0 %v1906
        %1935 = vmatprep.subr.bf16.mxu0 0
        %1936 = vmatpush2.bf16.msra.mxu0 0
        %1937 = vmatprep.subr.bf16.mxu0 0
        %1938 = vmatpush2.bf16.msra.mxu0 0
        %1939 = vmatprep.subr.bf16.mxu0 0
        %1940 = vmatpush2.bf16.msra.mxu0 0
        %1941 = vmatprep.subr.bf16.mxu0 0
        %1942 = vmatpush2.bf16.msra.mxu0 0
        %1943 = vmatprep.subr.bf16.mxu0 0
        %1944 = vmatpush2.bf16.msra.mxu0 0
        %1945 = vmatprep.subr.bf16.mxu0 0
        %1946 = vmatpush2.bf16.msra.mxu0 0
        %1947 = vmatprep.subr.bf16.mxu0 0
        %1948 = vmatpush2.bf16.msra.mxu0 0
        %1949 = vmatprep.subr.bf16.mxu0 0
        %1950 = vmatpush2.bf16.msra.mxu0 0
        %1951 = vmatprep.mubr.bf16.mxu0 0
        %1952 = vmatmul.mubr.bf16.gmra.mxu0 %v1917
        %v1953 = vpop.f32.mrf.mxu0
        %v1954 = vadd.f32 %v1914, %v1953
        %v1955 = vpop.f32.mrf.mxu0
        %v1956 = vpop.f32.mrf.mxu0
        %v1957 = vadd.f32 %v1914, %v1956
        %v1958 = vpop.f32.mrf.mxu0
        %1959 = vdwg.mxu0
        %v1960 = vmax.f32 %v1954, 0.0
        %v1961 = vmax.f32 %v1957, 0.0
        %v1962 = vpack.c.bf16 %v1961, %v1960
        %v1963 = vpack.c.bf16 %v1721, %v1720
        %v1964 = vpack.c.bf16 %v1723, %v1722
        %v1965 = vpack.c.bf16 %v1725, %v1724
        %v1966 = vpack.c.bf16 %v1727, %v1726
        %v1968 = vlaneseq
        %v1969 = vshrl.u32 %v1968, 7
        %v1970 = vsub.s32 0, %v1969
        %v1971 = vrot.slane %v1728, %v1970
        %v1974 = vsel %vm1664, %v1962, 0
        %1976 = vmatprep.subr.bf16.mxu0 0
        %1977 = vmatpush1.bf16.msra.mxu0 0
        %1978 = vmatprep.subr.bf16.mxu0 0
        %1979 = vmatpush1.bf16.msra.mxu0 0
        %1980 = vmatprep.subr.bf16.mxu0 0
        %1981 = vmatpush1.bf16.msra.mxu0 0
        %1982 = vmatprep.subr.bf16.mxu0 0
        %1983 = vmatpush1.bf16.msra.mxu0 0
        %1984 = vmatprep.subr.bf16.mxu0 0
        %1985 = vmatpush1.bf16.msra.mxu0 %v1966
        %1986 = vmatprep.subr.bf16.mxu0 0
        %1987 = vmatpush1.bf16.msra.mxu0 %v1965
        %1988 = vmatprep.subr.bf16.mxu0 0
        %1989 = vmatpush1.bf16.msra.mxu0 %v1964
        %1990 = vmatprep.subr.bf16.mxu0 0
        %1991 = vmatpush1.bf16.msra.mxu0 %v1963
        %1992 = vmatprep.subr.bf16.mxu0 0
        %1993 = vmatpush2.bf16.msra.mxu0 0
        %1994 = vmatprep.subr.bf16.mxu0 0
        %1995 = vmatpush2.bf16.msra.mxu0 0
        %1996 = vmatprep.subr.bf16.mxu0 0
        %1997 = vmatpush2.bf16.msra.mxu0 0
        %1998 = vmatprep.subr.bf16.mxu0 0
        %1999 = vmatpush2.bf16.msra.mxu0 0
        %2000 = vmatprep.subr.bf16.mxu0 0
        %2001 = vmatpush2.bf16.msra.mxu0 0
        %2002 = vmatprep.subr.bf16.mxu0 0
        %2003 = vmatpush2.bf16.msra.mxu0 0
        %2004 = vmatprep.subr.bf16.mxu0 0
        %2005 = vmatpush2.bf16.msra.mxu0 0
        %2006 = vmatprep.subr.bf16.mxu0 0
        %2007 = vmatpush2.bf16.msra.mxu0 0
        %2008 = vmatprep.mubr.bf16.mxu0 0
        %2009 = vmatmul.mubr.bf16.gmra.mxu0 %v1974
        %v2010 = vpop.f32.mrf.mxu0
        %v2011 = vadd.f32 %v1971, %v2010
        %v2012 = vpop.f32.mrf.mxu0
        %v2013 = vpop.f32.mrf.mxu0
        %v2014 = vadd.f32 %v1971, %v2013
        %v2015 = vpop.f32.mrf.mxu0
        %2016 = vdwg.mxu0
        %v2017 = vmax.f32 %v2011, 0.0
        %v2018 = vmax.f32 %v2014, 0.0
        %v2019 = vlaneseq
        %v2020 = vshrl.u32 %v2019, 7
        %v2021 = vsub.s32 0, %v2020
        %v2022 = vrot.slane %v1051, %v2021
        %vm2023 = vcmp.eq.s32.totalorder %v2022, %v1379
        %v2024 = vsel %vm2023, 1, 0
        %v2025 = vcvt.s32.f32 %v2024
        %v2026 = vpack.c.bf16 %v2025, %v2025
        %v2027 = vpack.c.bf16 %v2018, %v2017
        %v2029 = vsel %vm1392, %v2026, 0
        %v2032 = vsel %vm1396, %v2027, 0
        %2034 = vmatprep.subr.bf16.mxu0 0
        %2035 = vmatpush1.bf16.msra.mxu0 0
        %2036 = vmatprep.subr.bf16.mxu0 0
        %2037 = vmatpush1.bf16.msra.mxu0 0
        %2038 = vmatprep.subr.bf16.mxu0 0
        %2039 = vmatpush1.bf16.msra.mxu0 0
        %2040 = vmatprep.subr.bf16.mxu0 0
        %2041 = vmatpush1.bf16.msra.mxu0 0
        %2042 = vmatprep.subr.bf16.mxu0 0
        %2043 = vmatpush1.bf16.msra.mxu0 0
        %2044 = vmatprep.subr.bf16.mxu0 0
        %2045 = vmatpush1.bf16.msra.mxu0 0
        %2046 = vmatprep.subr.bf16.mxu0 0
        %2047 = vmatpush1.bf16.msra.mxu0 0
        %2048 = vmatprep.subr.bf16.mxu0 0
        %2049 = vmatpush1.bf16.msra.mxu0 %v2032
        %2050 = vmatprep.subr.bf16.mxu0 0
        %2051 = vmatpush2.bf16.msra.mxu0 0
        %2052 = vmatprep.subr.bf16.mxu0 0
        %2053 = vmatpush2.bf16.msra.mxu0 0
        %2054 = vmatprep.subr.bf16.mxu0 0
        %2055 = vmatpush2.bf16.msra.mxu0 0
        %2056 = vmatprep.subr.bf16.mxu0 0
        %2057 = vmatpush2.bf16.msra.mxu0 0
        %2058 = vmatprep.subr.bf16.mxu0 0
        %2059 = vmatpush2.bf16.msra.mxu0 0
        %2060 = vmatprep.subr.bf16.mxu0 0
        %2061 = vmatpush2.bf16.msra.mxu0 0
        %2062 = vmatprep.subr.bf16.mxu0 0
        %2063 = vmatpush2.bf16.msra.mxu0 0
        %2064 = vmatprep.subr.bf16.mxu0 0
        %2065 = vmatpush2.bf16.msra.mxu0 0
        %2066 = vmatprep.mubr.bf16.mxu0 0
        %2067 = vmatmul.mubr.bf16.gmra.mxu0 %v2029
        %v2068 = vpop.f32.mrf.mxu0
        %v2069 = vadd.f32 0.0, %v2068
        %v2070 = vpop.f32.mrf.mxu0
        %v2071 = vpop.f32.mrf.mxu0
        %v2072 = vpop.f32.mrf.mxu0
        %2073 = vdwg.mxu0
        %v2074 = vunpack.c.l.bf16 %v2026
        %vm2075 = vcmask 91136
        %v2076 = vsel %vm2075, %v2074, 0.0
        %2077 = vadd.xlane.f32.xlu0 %v2076
        %v2078 = vpop.xlane.xlu0 %2077
        %v2079 = vmax.f32 %v2078, 1.0
        %v2080 = vrcp.pop %v2079
        %v2081 = vmul.f32 %v2069, %v2080
        %vm2082 = vcmask 517120
        %2083 = vst.msk [vmem:[%s996] sm:$0x3] %vm2082, %v2081
        %s2084 = sand.u32 %s610, 1
        %s2085 = scalar_lea.sflag [#allocation4], %s2084
        %s2086 = sand.u32 %s610, 1
        %s2087 = smul.addr %s2086, 2
        %s2088 = scalar_lea.vmem [#allocation11], %s2087
        // Predicated region
        $region133: #{tpu_custom_call.1} parent=111 // pred_check
          %p2089 = pneg %p620
        $region134: #{tpu_custom_call.1} parent=111 // pred_check_branch
          %2091 = sbr.rel (%p2089) target = $region136
        $region135: #{tpu_custom_call.1} parent=111 // pred_region
          %s2093 = ssub.s32 32, 32
          %2094 = vsyncadd %s2085, %s2093
          %s2095 = smul.addr %s44, 32
          %s2096 = scalar_lea.hbm %s23, %s2095
          %s2098 = sshll.u32 %s2088, 4
          %s2099 = int_to_ptr.vmem [resolvable:$true] %s2098
          %2101 = dma.vmem_to_hbm [thread:$0]  %s2099, 32, %s2096, %s2085
        $region136: #{tpu_custom_call.1} parent=111 // pred_fallthru
          _
      $region112: #{tpu_custom_call.1} parent=5 // pred_fallthru
        _
      %p2102 = scmp.le.s32.totalorder 2, %s39
      // Predicated region
      $region137: #{tpu_custom_call.1} parent=5 // pred_check
        %p2103 = pneg %p2102
      $region138: #{tpu_custom_call.1} parent=5 // pred_check_branch
        %2105 = sbr.rel (%p2103) target = $region140
      $region139: #{tpu_custom_call.1} parent=5 // pred_region
        %s2106 = ssub.s32 %s39, 2
        // Predicated region
        $region141: #{tpu_custom_call.1} parent=139 // pred_check
          %p2107 = pneg %p626
        $region142: #{tpu_custom_call.1} parent=139 // pred_check_branch
          %2109 = sbr.rel (%p2107) target = $region144
        $region143: #{tpu_custom_call.1} parent=139 // pred_region
          %s2110 = sand.u32 %s611, 1
          %s2111 = scalar_lea.sflag [#allocation4], %s2110
          %s2112 = sand.u32 %s611, 1
          %s2113 = smul.addr %s2112, 2
          %s2114 = scalar_lea.vmem [#allocation11], %s2113
          %2115 = dma.done %s2111, 32
        $region144: #{tpu_custom_call.1} parent=139 // pred_fallthru
          _
      $region140: #{tpu_custom_call.1} parent=5 // pred_fallthru
        _
    $region6: #{tpu_custom_call.1} parent=1 // loop_footer
      %s43 = sadd.s32 1, %s39
    $region7: #{tpu_custom_call.1} parent=1 // loop_footer_branch
      %38 = sbr.rel target = $region3
    $region8: #{tpu_custom_call.1} parent=1 // loop_exit
      _
    %2116 = vsyncpa [#allocation3], 1
    %s2117 = scalar_lea.sflag [#allocation3], 1
    %2118 = vsyncpa %s2117, 1
    %2119 = vsyncpa [#allocation6], 1
    %s2120 = scalar_lea.sflag [#allocation6], 1
    %2121 = vsyncpa %s2120, 1
    %2122 = vsyncpa [#allocation9], 1
    %s2123 = scalar_lea.sflag [#allocation9], 1
    %2124 = vsyncpa %s2123, 1
    %2125 = vsyncpa [#allocation4], 1
    %s2126 = scalar_lea.sflag [#allocation4], 1
    %2127 = vsyncpa %s2126, 1

</llo_original>
